<compile_context>
chip_gen: v7x
topology: tpu7x:2x2x1
jax: 0.10.0
libtpu: 0.0.40
codegen_flags: <defaults>
</compile_context>

<pallas_src>
import functools
import math

import jax
import jax.numpy as jnp
import numpy as np
from jax.experimental import pallas as pl
from jax.experimental.pallas import tpu as pltpu


# ----------------------------- kernels ------------------------------------


def _layernorm(x, gamma, beta, eps=1e-5):
    mean = jnp.mean(x, axis=-1, keepdims=True)
    var = jnp.mean(jnp.square(x - mean), axis=-1, keepdims=True)
    return (x - mean) * jax.lax.rsqrt(var + eps) * gamma + beta


def decoder_stack_kernel(
    x_ref,        # (1, S, D) f32  embeddings+PE for one batch element
    wqkv_ref,     # (D, 3D)  bf16  fused qkv weight (pre-transposed, q pre-scaled)
    bqkv_ref,     # (1, 3D)  f32   fused qkv bias (q part pre-scaled)
    wo_ref,       # (D, D)   bf16  attention output weight (pre-transposed)
    w1_ref,       # (D, F)   bf16  FFN weight 1 (pre-transposed)
    b1_ref,       # (1, F)   f32
    w2_ref,       # (F, D)   bf16  FFN weight 2 (pre-transposed)
    vecs_ref,     # (8, D)   f32   rows: [bo, ln1_g, ln1_b, ffn_b2, ln3_g, ln3_b, 0, 0]
    o_ref,        # (1, S, D) f32
    act_ref,      # (S, D)   f32   VMEM scratch: activation carried across layers
    *, num_heads,
):
    layer = pl.program_id(1)

    @pl.when(layer == 0)
    def _():
        act_ref[...] = x_ref[0]

    x = act_ref[...]                              # (S, D) f32
    S, D = x.shape
    dk = D // num_heads

    bo = vecs_ref[0:1, :]
    g1 = vecs_ref[1:2, :]
    be1 = vecs_ref[2:3, :]
    b2 = vecs_ref[3:4, :]
    g3 = vecs_ref[4:5, :]
    be3 = vecs_ref[5:6, :]

    # --- fused QKV projection (q already scaled by 1/sqrt(dk) in the weights) --
    qkv = jnp.dot(x.astype(jnp.bfloat16), wqkv_ref[...],
                  preferred_element_type=jnp.float32) + bqkv_ref[...]   # (S, 3D)
    q = qkv[:, 0 * D:1 * D]
    k = qkv[:, 1 * D:2 * D]
    v = qkv[:, 2 * D:3 * D]

    row = jax.lax.broadcasted_iota(jnp.int32, (S, S), 0)
    col = jax.lax.broadcasted_iota(jnp.int32, (S, S), 1)
    causal = row >= col                           # lower-triangular mask

    wo = wo_ref[...]                              # (D, D) bf16
    attn = jnp.zeros((S, D), jnp.float32)
    for h in range(num_heads):                    # static loop, small H
        qh = q[:, h * dk:(h + 1) * dk].astype(jnp.bfloat16)
        kh = k[:, h * dk:(h + 1) * dk].astype(jnp.bfloat16)
        vh = v[:, h * dk:(h + 1) * dk].astype(jnp.bfloat16)
        # scores: contract head dim of both (no explicit transpose in-kernel)
        s = jnp.einsum('qd,kd->qk', qh, kh, preferred_element_type=jnp.float32)
        s = jnp.where(causal, s, -1e9)
        s = s - jnp.max(s, axis=-1, keepdims=True)
        p = jnp.exp(s)
        p = p * pl.reciprocal(jnp.sum(p, axis=-1, keepdims=True), approx=True)
        oh = jnp.dot(p.astype(jnp.bfloat16), vh,
                     preferred_element_type=jnp.float32)            # (S, dk)
        # accumulate head output directly through Wo (no lane concatenate)
        attn = attn + jnp.dot(oh.astype(jnp.bfloat16),
                              wo[h * dk:(h + 1) * dk, :],
                              preferred_element_type=jnp.float32)
    attn = attn + bo

    # --- residual + LayerNorm 1 (f32 elementwise) ---------------------------
    h1 = _layernorm(x + attn, g1, be1)

    # --- feed-forward: Linear -> ReLU -> Linear -----------------------------
    ff = jnp.dot(h1.astype(jnp.bfloat16), w1_ref[...],
                 preferred_element_type=jnp.float32) + b1_ref[...]
    ff = jnp.maximum(ff, 0.0)
    ff = jnp.dot(ff.astype(jnp.bfloat16), w2_ref[...],
                 preferred_element_type=jnp.float32) + b2

    # --- residual + LayerNorm 3 ---------------------------------------------
    h2 = _layernorm(h1 + ff, g3, be3)

    act_ref[...] = h2
    @pl.when(layer == pl.num_programs(1) - 1)
    def _():
        o_ref[0] = h2.astype(o_ref.dtype)


def output_projection_kernel(x_ref, w_ref, b_ref, o_ref):
    # x: (1, S, D) f32, w: (D, TV) bf16 pre-transposed, b: (1, TV) f32
    x = x_ref[0]
    logits = jnp.dot(x.astype(jnp.bfloat16), w_ref[...],
                     preferred_element_type=jnp.float32) + b_ref[...]
    o_ref[0] = logits.astype(o_ref.dtype)


# ----------------------------- wrappers ------------------------------------


def run_decoder_stack(x, p, num_heads):
    B, S, D = x.shape
    L = p["w_qkv"].shape[0]
    F = p["w1"].shape[2]

    def l_map(b, l):
        return (l, 0, 0)

    in_specs = [
        pl.BlockSpec((1, S, D), lambda b, l: (b, 0, 0)),   # resident across layers
        pl.BlockSpec((None, D, 3 * D), l_map),
        pl.BlockSpec((None, 1, 3 * D), l_map),
        pl.BlockSpec((None, D, D), l_map),
        pl.BlockSpec((None, D, F), l_map),
        pl.BlockSpec((None, 1, F), l_map),
        pl.BlockSpec((None, F, D), l_map),
        pl.BlockSpec((None, 8, D), l_map),
    ]
    return pl.pallas_call(
        functools.partial(decoder_stack_kernel, num_heads=num_heads),
        out_shape=jax.ShapeDtypeStruct((B, S, D), jnp.float32),
        grid=(B, L),
        in_specs=in_specs,
        out_specs=pl.BlockSpec((1, S, D), lambda b, l: (b, 0, 0)),
        scratch_shapes=[pltpu.VMEM((S, D), jnp.float32)],
        compiler_params=pltpu.CompilerParams(
            dimension_semantics=("parallel", "arbitrary")),
    )(x, p["w_qkv"], p["b_qkv"], p["w_o"], p["w1"], p["b1"], p["w2"], p["vecs"])


def run_output_projection(x, w_t, b, tile_v=128):
    B, S, D = x.shape
    V = w_t.shape[1]
    tile_v = min(tile_v, V)
    n_v = pl.cdiv(V, tile_v)
    return pl.pallas_call(
        output_projection_kernel,
        out_shape=jax.ShapeDtypeStruct((B, S, V), jnp.float32),
        grid=(B, n_v),
        in_specs=[
            pl.BlockSpec((1, S, D), lambda b, v: (b, 0, 0)),
            pl.BlockSpec((D, tile_v), lambda b, v: (0, v)),
            pl.BlockSpec((1, tile_v), lambda b, v: (0, v)),
        ],
        out_specs=pl.BlockSpec((1, S, tile_v), lambda b, v: (b, 0, v)),
        compiler_params=pltpu.CompilerParams(
            dimension_semantics=("parallel", "parallel")),
    )(x, w_t, b)


# ----------------------------- model setup ---------------------------------


def sinusoidal_pe(max_seq_len, d_model):
    pos = np.arange(max_seq_len, dtype=np.float32)[:, None]
    div = np.exp(np.arange(0, d_model, 2, dtype=np.float32)
                 * (-np.log(10000.0) / d_model))
    pe = np.zeros((max_seq_len, d_model), dtype=np.float32)
    pe[:, 0::2] = np.sin(pos * div)
    pe[:, 1::2] = np.cos(pos * div)
    return jnp.asarray(pe)


def init_params(key, vocab_size, d_model, num_heads, num_layers, d_ff,
                pad_token_id=0):
    """PyTorch-equivalent init (Linear: N(0,0.02^2), zero bias; LN: ones/zeros;
    Embedding: N(0,0.02^2) with padding row zeroed), stored in a TPU-friendly
    layout: weights pre-transposed to (in, out), fused QKV, stacked over layers,
    bf16 for MXU operands, scale folded into the q projection."""
    dk = d_model // num_heads
    scale = 1.0 / math.sqrt(dk)

    def normal(k, shape):
        return 0.02 * jax.random.normal(k, shape, dtype=jnp.float32)

    keys = jax.random.split(key, 2 + num_layers)
    emb = normal(keys[0], (vocab_size, d_model)).at[pad_token_id].set(0.0)

    w_qkv, b_qkv, w_o, w1, b1, w2, vecs = [], [], [], [], [], [], []
    for li in range(num_layers):
        ks = jax.random.split(keys[1 + li], 6)
        wq = normal(ks[0], (d_model, d_model))        # PyTorch layout (out, in)
        wk = normal(ks[1], (d_model, d_model))
        wv = normal(ks[2], (d_model, d_model))
        wo = normal(ks[3], (d_model, d_model))
        wf1 = normal(ks[4], (d_ff, d_model))
        wf2 = normal(ks[5], (d_model, d_ff))

        # fused qkv, pre-transposed to (D, 3D); 1/sqrt(dk) folded into q part
        wqkv_t = jnp.concatenate([wq.T * scale, wk.T, wv.T], axis=1)
        # biases are zero; the q-part bias would also carry the scale factor
        bqkv = jnp.zeros((1, 3 * d_model), jnp.float32)

        w_qkv.append(wqkv_t.astype(jnp.bfloat16))
        b_qkv.append(bqkv)
        w_o.append(wo.T.astype(jnp.bfloat16))
        w1.append(wf1.T.astype(jnp.bfloat16))
        b1.append(jnp.zeros((1, d_ff), jnp.float32))
        w2.append(wf2.T.astype(jnp.bfloat16))
        # packed small vectors: [bo, ln1_g, ln1_b, ffn_b2, ln3_g, ln3_b, 0, 0]
        vecs.append(jnp.stack([
            jnp.zeros((d_model,), jnp.float32),   # bo
            jnp.ones((d_model,), jnp.float32),    # ln1 gamma
            jnp.zeros((d_model,), jnp.float32),   # ln1 beta
            jnp.zeros((d_model,), jnp.float32),   # ffn b2
            jnp.ones((d_model,), jnp.float32),    # ln3 gamma
            jnp.zeros((d_model,), jnp.float32),   # ln3 beta
            jnp.zeros((d_model,), jnp.float32),   # pad
            jnp.zeros((d_model,), jnp.float32),   # pad
        ]))

    out_w = normal(keys[-1], (vocab_size, d_model))
    return dict(
        emb=emb,
        w_qkv=jnp.stack(w_qkv), b_qkv=jnp.stack(b_qkv),
        w_o=jnp.stack(w_o),
        w1=jnp.stack(w1), b1=jnp.stack(b1),
        w2=jnp.stack(w2),
        vecs=jnp.stack(vecs),
        out_w=out_w.T.astype(jnp.bfloat16),               # (D, V)
        out_b=jnp.zeros((1, vocab_size), jnp.float32),
    )


def gpt_forward(input_ids, params, d_model, num_heads, max_seq_len):
    B, S = input_ids.shape
    # token embedding * sqrt(d_model) + sinusoidal PE (glue, not hot path)
    x = params["emb"][input_ids] * (d_model ** 0.5)
    x = x + sinusoidal_pe(max_seq_len, d_model)[:S][None, :, :]
    # dropout is identity in eval mode
    x = run_decoder_stack(x, params, num_heads)            # all layers, one call
    logits = run_output_projection(x, params["out_w"], params["out_b"])
    return logits


# ----------------------------- main -----------------------------------------


if __name__ == "__main__":
    # Lane-dense small config: D and V are multiples of 128, S a multiple of 8.
    VOCAB, D_MODEL, N_HEADS, N_LAYERS, D_FF = 256, 128, 4, 2, 256
    MAX_SEQ, B, S = 128, 2, 8

    key = jax.random.PRNGKey(0)
    pkey, dkey = jax.random.split(key)
    params = init_params(pkey, VOCAB, D_MODEL, N_HEADS, N_LAYERS, D_FF)

    input_ids = jax.random.randint(dkey, (B, S), 0, VOCAB, dtype=jnp.int32)

    logits = gpt_forward(input_ids, params, D_MODEL, N_HEADS, MAX_SEQ)
    jax.block_until_ready(logits)

    assert logits.shape == (B, S, VOCAB), logits.shape
    assert logits.dtype == jnp.float32
    assert bool(jnp.all(jnp.isfinite(logits)))
    print("KERNEL_OK")
</pallas_src>

<mosaic_0001>
module attributes {stable_mosaic.version = 11 : i64} {
  func.func @decoder_stack_kernel(%arg0: i32, %arg1: i32, %arg2: memref<1x8x128xf32, #tpu.memory_space<vmem>>, %arg3: memref<1x128x384xbf16, #tpu.memory_space<vmem>>, %arg4: memref<1x1x384xf32, #tpu.memory_space<vmem>>, %arg5: memref<1x128x128xbf16, #tpu.memory_space<vmem>>, %arg6: memref<1x128x256xbf16, #tpu.memory_space<vmem>>, %arg7: memref<1x1x256xf32, #tpu.memory_space<vmem>>, %arg8: memref<1x256x128xbf16, #tpu.memory_space<vmem>>, %arg9: memref<1x8x128xf32, #tpu.memory_space<vmem>>, %arg10: memref<1x8x128xf32, #tpu.memory_space<vmem>>, %arg11: memref<8x128xf32, #tpu.memory_space<vmem>>) attributes {dimension_semantics = [#tpu.dimension_semantics<parallel>, #tpu.dimension_semantics<arbitrary>], iteration_bounds = array<i64: 2, 2>, scalar_prefetch = 0 : i64, scratch_operands = 1 : i64, tpu.core_type = #tpu.core_type<tc>, window_params = [{transform_indices = @transform_0, window_bounds = array<i64: 1, 8, 128>}, {transform_indices = @transform_1, window_bounds = array<i64: 1, 128, 384>}, {transform_indices = @transform_2, window_bounds = array<i64: 1, 1, 384>}, {transform_indices = @transform_3, window_bounds = array<i64: 1, 128, 128>}, {transform_indices = @transform_4, window_bounds = array<i64: 1, 128, 256>}, {transform_indices = @transform_5, window_bounds = array<i64: 1, 1, 256>}, {transform_indices = @transform_6, window_bounds = array<i64: 1, 256, 128>}, {transform_indices = @transform_7, window_bounds = array<i64: 1, 8, 128>}, {transform_indices = @transform_8, window_bounds = array<i64: 1, 8, 128>}]} {
    %c0_i32 = arith.constant 0 : i32
    %0 = arith.cmpi eq, %arg1, %c0_i32 : i32
    %1 = arith.extui %0 : i1 to i32
    %c0_i32_0 = arith.constant 0 : i32
    %2 = arith.cmpi ne, %1, %c0_i32_0 : i32
    scf.if %2 {
      %c0_74 = arith.constant 0 : index
      %c0_75 = arith.constant 0 : index
      %c0_76 = arith.constant 0 : index
      %201 = vector.load %arg2[%c0_74, %c0_75, %c0_76] : memref<1x8x128xf32, #tpu.memory_space<vmem>>, vector<1x8x128xf32>
      %202 = vector.shape_cast %201 : vector<1x8x128xf32> to vector<8x128xf32>
      %c0_77 = arith.constant 0 : index
      %c0_78 = arith.constant 0 : index
      %203 = vector.load %arg11[%c0_77, %c0_78] : memref<8x128xf32, #tpu.memory_space<vmem>>, vector<8x128xf32>
      tpu.vector_store %arg11[%c0_77, %c0_78], %202 {strides = array<i32>} : memref<8x128xf32, #tpu.memory_space<vmem>>, vector<8x128xf32>,
    } else {
    }
    %c0 = arith.constant 0 : index
    %c0_1 = arith.constant 0 : index
    %3 = vector.load %arg11[%c0, %c0_1] : memref<8x128xf32, #tpu.memory_space<vmem>>, vector<8x128xf32>
    %c0_2 = arith.constant 0 : index
    %c0_3 = arith.constant 0 : index
    %c0_4 = arith.constant 0 : index
    %4 = vector.load %arg9[%c0_2, %c0_3, %c0_4] : memref<1x8x128xf32, #tpu.memory_space<vmem>>, vector<1x1x128xf32>
    %5 = vector.shape_cast %4 : vector<1x1x128xf32> to vector<1x128xf32>
    %c0_5 = arith.constant 0 : index
    %c1 = arith.constant 1 : index
    %c0_6 = arith.constant 0 : index
    %6 = vector.load %arg9[%c0_5, %c1, %c0_6] : memref<1x8x128xf32, #tpu.memory_space<vmem>>, vector<1x1x128xf32>
    %7 = vector.shape_cast %6 : vector<1x1x128xf32> to vector<1x128xf32>
    %c0_7 = arith.constant 0 : index
    %c2 = arith.constant 2 : index
    %c0_8 = arith.constant 0 : index
    %8 = vector.load %arg9[%c0_7, %c2, %c0_8] : memref<1x8x128xf32, #tpu.memory_space<vmem>>, vector<1x1x128xf32>
    %9 = vector.shape_cast %8 : vector<1x1x128xf32> to vector<1x128xf32>
    %c0_9 = arith.constant 0 : index
    %c3 = arith.constant 3 : index
    %c0_10 = arith.constant 0 : index
    %10 = vector.load %arg9[%c0_9, %c3, %c0_10] : memref<1x8x128xf32, #tpu.memory_space<vmem>>, vector<1x1x128xf32>
    %11 = vector.shape_cast %10 : vector<1x1x128xf32> to vector<1x128xf32>
    %c0_11 = arith.constant 0 : index
    %c4 = arith.constant 4 : index
    %c0_12 = arith.constant 0 : index
    %12 = vector.load %arg9[%c0_11, %c4, %c0_12] : memref<1x8x128xf32, #tpu.memory_space<vmem>>, vector<1x1x128xf32>
    %13 = vector.shape_cast %12 : vector<1x1x128xf32> to vector<1x128xf32>
    %c0_13 = arith.constant 0 : index
    %c5 = arith.constant 5 : index
    %c0_14 = arith.constant 0 : index
    %14 = vector.load %arg9[%c0_13, %c5, %c0_14] : memref<1x8x128xf32, #tpu.memory_space<vmem>>, vector<1x1x128xf32>
    %15 = vector.shape_cast %14 : vector<1x1x128xf32> to vector<1x128xf32>
    %16 = arith.truncf %3 : vector<8x128xf32> to vector<8x128xbf16>
    %c0_15 = arith.constant 0 : index
    %c0_16 = arith.constant 0 : index
    %c0_17 = arith.constant 0 : index
    %17 = vector.load %arg3[%c0_15, %c0_16, %c0_17] : memref<1x128x384xbf16, #tpu.memory_space<vmem>>, vector<1x128x384xbf16>
    %18 = vector.shape_cast %17 : vector<1x128x384xbf16> to vector<128x384xbf16>
    %cst = arith.constant dense<0.000000e+00> : vector<8x384xf32>
    %19 = tpu.matmul %16, %18, %cst {dimension_numbers = #tpu.dot_dimension_numbers<[1], [0], [0], [1], [0, 0, 1, 1], [], []>} : vector<8x128xbf16>, vector<128x384xbf16>, vector<8x384xf32> -> vector<8x384xf32>
    %c0_18 = arith.constant 0 : index
    %c0_19 = arith.constant 0 : index
    %c0_20 = arith.constant 0 : index
    %20 = vector.load %arg4[%c0_18, %c0_19, %c0_20] : memref<1x1x384xf32, #tpu.memory_space<vmem>>, vector<1x1x384xf32>
    %21 = vector.shape_cast %20 : vector<1x1x384xf32> to vector<1x384xf32>
    %22 = vector.broadcast %21 : vector<1x384xf32> to vector<8x384xf32>
    %23 = arith.addf %19, %22 : vector<8x384xf32>
    %24 = vector.extract_strided_slice %23 {offsets = [0, 0], sizes = [8, 128], strides = [1, 1]} : vector<8x384xf32> to vector<8x128xf32>
    %25 = vector.extract_strided_slice %23 {offsets = [0, 128], sizes = [8, 128], strides = [1, 1]} : vector<8x384xf32> to vector<8x128xf32>
    %26 = vector.extract_strided_slice %23 {offsets = [0, 256], sizes = [8, 128], strides = [1, 1]} : vector<8x384xf32> to vector<8x128xf32>
    %27 = tpu.iota {dimensions = array<i32: 0>} : vector<8x8xi32>
    %28 = tpu.iota {dimensions = array<i32: 1>} : vector<8x8xi32>
    %29 = arith.cmpi sge, %27, %28 : vector<8x8xi32>
    %c0_21 = arith.constant 0 : index
    %c0_22 = arith.constant 0 : index
    %c0_23 = arith.constant 0 : index
    %30 = vector.load %arg5[%c0_21, %c0_22, %c0_23] : memref<1x128x128xbf16, #tpu.memory_space<vmem>>, vector<1x128x128xbf16>
    %31 = vector.shape_cast %30 : vector<1x128x128xbf16> to vector<128x128xbf16>
    %cst_24 = arith.constant 0.000000e+00 : f32
    %32 = vector.broadcast %cst_24 : f32 to vector<8x128xf32>
    %33 = vector.extract_strided_slice %24 {offsets = [0, 0], sizes = [8, 32], strides = [1, 1]} : vector<8x128xf32> to vector<8x32xf32>
    %34 = arith.truncf %33 : vector<8x32xf32> to vector<8x32xbf16>
    %35 = vector.extract_strided_slice %25 {offsets = [0, 0], sizes = [8, 32], strides = [1, 1]} : vector<8x128xf32> to vector<8x32xf32>
    %36 = arith.truncf %35 : vector<8x32xf32> to vector<8x32xbf16>
    %37 = vector.extract_strided_slice %26 {offsets = [0, 0], sizes = [8, 32], strides = [1, 1]} : vector<8x128xf32> to vector<8x32xf32>
    %38 = arith.truncf %37 : vector<8x32xf32> to vector<8x32xbf16>
    "tpu.trace_start"() <{level = 10 : i32, message = "qd,kd->qk"}> : () -> ()
    %cst_25 = arith.constant dense<0.000000e+00> : vector<8x8xf32>
    %39 = tpu.matmul %34, %36, %cst_25 {dimension_numbers = #tpu.dot_dimension_numbers<[1], [1], [0], [0], [0, 0, 1, 0], [], []>} : vector<8x32xbf16>, vector<8x32xbf16>, vector<8x8xf32> -> vector<8x8xf32>
    %cst_26 = arith.constant -1.000000e+09 : f32
    "tpu.trace_stop"() : () -> ()
    %40 = vector.broadcast %cst_26 : f32 to vector<8x8xf32>
    %41 = arith.select %29, %39, %40 : vector<8x8xi1>, vector<8x8xf32>
    %cst_27 = arith.constant dense<0xFF800000> : vector<8xf32>
    %42 = vector.multi_reduction <maximumf>, %41, %cst_27 [1] : vector<8x8xf32> to vector<8xf32>
    %43 = vector.shape_cast %42 : vector<8xf32> to vector<8x1xf32>
    %44 = vector.broadcast %43 : vector<8x1xf32> to vector<8x8xf32>
    %45 = arith.subf %41, %44 : vector<8x8xf32>
    %46 = math.exp %45 : vector<8x8xf32>
    %cst_28 = arith.constant dense<0.000000e+00> : vector<8xf32>
    %47 = vector.multi_reduction <add>, %46, %cst_28 [1] : vector<8x8xf32> to vector<8xf32>
    %48 = vector.shape_cast %47 : vector<8xf32> to vector<8x1xf32>
    %49 = tpu.reciprocal %48 {approx = true} : vector<8x1xf32> -> vector<8x1xf32>
    %50 = vector.broadcast %49 : vector<8x1xf32> to vector<8x8xf32>
    %51 = arith.mulf %46, %50 : vector<8x8xf32>
    %52 = arith.truncf %51 : vector<8x8xf32> to vector<8x8xbf16>
    %cst_29 = arith.constant dense<0.000000e+00> : vector<8x32xf32>
    %53 = tpu.matmul %52, %38, %cst_29 {dimension_numbers = #tpu.dot_dimension_numbers<[1], [0], [0], [1], [0, 0, 1, 1], [], []>} : vector<8x8xbf16>, vector<8x32xbf16>, vector<8x32xf32> -> vector<8x32xf32>
    %54 = arith.truncf %53 : vector<8x32xf32> to vector<8x32xbf16>
    %55 = vector.extract_strided_slice %31 {offsets = [0, 0], sizes = [32, 128], strides = [1, 1]} : vector<128x128xbf16> to vector<32x128xbf16>
    %cst_30 = arith.constant dense<0.000000e+00> : vector<8x128xf32>
    %56 = tpu.matmul %54, %55, %cst_30 {dimension_numbers = #tpu.dot_dimension_numbers<[1], [0], [0], [1], [0, 0, 1, 1], [], []>} : vector<8x32xbf16>, vector<32x128xbf16>, vector<8x128xf32> -> vector<8x128xf32>
    %57 = arith.addf %32, %56 : vector<8x128xf32>
    %58 = vector.extract_strided_slice %24 {offsets = [0, 32], sizes = [8, 32], strides = [1, 1]} : vector<8x128xf32> to vector<8x32xf32>
    %59 = arith.truncf %58 : vector<8x32xf32> to vector<8x32xbf16>
    %60 = vector.extract_strided_slice %25 {offsets = [0, 32], sizes = [8, 32], strides = [1, 1]} : vector<8x128xf32> to vector<8x32xf32>
    %61 = arith.truncf %60 : vector<8x32xf32> to vector<8x32xbf16>
    %62 = vector.extract_strided_slice %26 {offsets = [0, 32], sizes = [8, 32], strides = [1, 1]} : vector<8x128xf32> to vector<8x32xf32>
    %63 = arith.truncf %62 : vector<8x32xf32> to vector<8x32xbf16>
    "tpu.trace_start"() <{level = 10 : i32, message = "qd,kd->qk"}> : () -> ()
    %cst_31 = arith.constant dense<0.000000e+00> : vector<8x8xf32>
    %64 = tpu.matmul %59, %61, %cst_31 {dimension_numbers = #tpu.dot_dimension_numbers<[1], [1], [0], [0], [0, 0, 1, 0], [], []>} : vector<8x32xbf16>, vector<8x32xbf16>, vector<8x8xf32> -> vector<8x8xf32>
    %cst_32 = arith.constant -1.000000e+09 : f32
    "tpu.trace_stop"() : () -> ()
    %65 = vector.broadcast %cst_32 : f32 to vector<8x8xf32>
    %66 = arith.select %29, %64, %65 : vector<8x8xi1>, vector<8x8xf32>
    %cst_33 = arith.constant dense<0xFF800000> : vector<8xf32>
    %67 = vector.multi_reduction <maximumf>, %66, %cst_33 [1] : vector<8x8xf32> to vector<8xf32>
    %68 = vector.shape_cast %67 : vector<8xf32> to vector<8x1xf32>
    %69 = vector.broadcast %68 : vector<8x1xf32> to vector<8x8xf32>
    %70 = arith.subf %66, %69 : vector<8x8xf32>
    %71 = math.exp %70 : vector<8x8xf32>
    %cst_34 = arith.constant dense<0.000000e+00> : vector<8xf32>
    %72 = vector.multi_reduction <add>, %71, %cst_34 [1] : vector<8x8xf32> to vector<8xf32>
    %73 = vector.shape_cast %72 : vector<8xf32> to vector<8x1xf32>
    %74 = tpu.reciprocal %73 {approx = true} : vector<8x1xf32> -> vector<8x1xf32>
    %75 = vector.broadcast %74 : vector<8x1xf32> to vector<8x8xf32>
    %76 = arith.mulf %71, %75 : vector<8x8xf32>
    %77 = arith.truncf %76 : vector<8x8xf32> to vector<8x8xbf16>
    %cst_35 = arith.constant dense<0.000000e+00> : vector<8x32xf32>
    %78 = tpu.matmul %77, %63, %cst_35 {dimension_numbers = #tpu.dot_dimension_numbers<[1], [0], [0], [1], [0, 0, 1, 1], [], []>} : vector<8x8xbf16>, vector<8x32xbf16>, vector<8x32xf32> -> vector<8x32xf32>
    %79 = arith.truncf %78 : vector<8x32xf32> to vector<8x32xbf16>
    %80 = vector.extract_strided_slice %31 {offsets = [32, 0], sizes = [32, 128], strides = [1, 1]} : vector<128x128xbf16> to vector<32x128xbf16>
    %cst_36 = arith.constant dense<0.000000e+00> : vector<8x128xf32>
    %81 = tpu.matmul %79, %80, %cst_36 {dimension_numbers = #tpu.dot_dimension_numbers<[1], [0], [0], [1], [0, 0, 1, 1], [], []>} : vector<8x32xbf16>, vector<32x128xbf16>, vector<8x128xf32> -> vector<8x128xf32>
    %82 = arith.addf %57, %81 : vector<8x128xf32>
    %83 = vector.extract_strided_slice %24 {offsets = [0, 64], sizes = [8, 32], strides = [1, 1]} : vector<8x128xf32> to vector<8x32xf32>
    %84 = arith.truncf %83 : vector<8x32xf32> to vector<8x32xbf16>
    %85 = vector.extract_strided_slice %25 {offsets = [0, 64], sizes = [8, 32], strides = [1, 1]} : vector<8x128xf32> to vector<8x32xf32>
    %86 = arith.truncf %85 : vector<8x32xf32> to vector<8x32xbf16>
    %87 = vector.extract_strided_slice %26 {offsets = [0, 64], sizes = [8, 32], strides = [1, 1]} : vector<8x128xf32> to vector<8x32xf32>
    %88 = arith.truncf %87 : vector<8x32xf32> to vector<8x32xbf16>
    "tpu.trace_start"() <{level = 10 : i32, message = "qd,kd->qk"}> : () -> ()
    %cst_37 = arith.constant dense<0.000000e+00> : vector<8x8xf32>
    %89 = tpu.matmul %84, %86, %cst_37 {dimension_numbers = #tpu.dot_dimension_numbers<[1], [1], [0], [0], [0, 0, 1, 0], [], []>} : vector<8x32xbf16>, vector<8x32xbf16>, vector<8x8xf32> -> vector<8x8xf32>
    %cst_38 = arith.constant -1.000000e+09 : f32
    "tpu.trace_stop"() : () -> ()
    %90 = vector.broadcast %cst_38 : f32 to vector<8x8xf32>
    %91 = arith.select %29, %89, %90 : vector<8x8xi1>, vector<8x8xf32>
    %cst_39 = arith.constant dense<0xFF800000> : vector<8xf32>
    %92 = vector.multi_reduction <maximumf>, %91, %cst_39 [1] : vector<8x8xf32> to vector<8xf32>
    %93 = vector.shape_cast %92 : vector<8xf32> to vector<8x1xf32>
    %94 = vector.broadcast %93 : vector<8x1xf32> to vector<8x8xf32>
    %95 = arith.subf %91, %94 : vector<8x8xf32>
    %96 = math.exp %95 : vector<8x8xf32>
    %cst_40 = arith.constant dense<0.000000e+00> : vector<8xf32>
    %97 = vector.multi_reduction <add>, %96, %cst_40 [1] : vector<8x8xf32> to vector<8xf32>
    %98 = vector.shape_cast %97 : vector<8xf32> to vector<8x1xf32>
    %99 = tpu.reciprocal %98 {approx = true} : vector<8x1xf32> -> vector<8x1xf32>
    %100 = vector.broadcast %99 : vector<8x1xf32> to vector<8x8xf32>
    %101 = arith.mulf %96, %100 : vector<8x8xf32>
    %102 = arith.truncf %101 : vector<8x8xf32> to vector<8x8xbf16>
    %cst_41 = arith.constant dense<0.000000e+00> : vector<8x32xf32>
    %103 = tpu.matmul %102, %88, %cst_41 {dimension_numbers = #tpu.dot_dimension_numbers<[1], [0], [0], [1], [0, 0, 1, 1], [], []>} : vector<8x8xbf16>, vector<8x32xbf16>, vector<8x32xf32> -> vector<8x32xf32>
    %104 = arith.truncf %103 : vector<8x32xf32> to vector<8x32xbf16>
    %105 = vector.extract_strided_slice %31 {offsets = [64, 0], sizes = [32, 128], strides = [1, 1]} : vector<128x128xbf16> to vector<32x128xbf16>
    %cst_42 = arith.constant dense<0.000000e+00> : vector<8x128xf32>
    %106 = tpu.matmul %104, %105, %cst_42 {dimension_numbers = #tpu.dot_dimension_numbers<[1], [0], [0], [1], [0, 0, 1, 1], [], []>} : vector<8x32xbf16>, vector<32x128xbf16>, vector<8x128xf32> -> vector<8x128xf32>
    %107 = arith.addf %82, %106 : vector<8x128xf32>
    %108 = vector.extract_strided_slice %24 {offsets = [0, 96], sizes = [8, 32], strides = [1, 1]} : vector<8x128xf32> to vector<8x32xf32>
    %109 = arith.truncf %108 : vector<8x32xf32> to vector<8x32xbf16>
    %110 = vector.extract_strided_slice %25 {offsets = [0, 96], sizes = [8, 32], strides = [1, 1]} : vector<8x128xf32> to vector<8x32xf32>
    %111 = arith.truncf %110 : vector<8x32xf32> to vector<8x32xbf16>
    %112 = vector.extract_strided_slice %26 {offsets = [0, 96], sizes = [8, 32], strides = [1, 1]} : vector<8x128xf32> to vector<8x32xf32>
    %113 = arith.truncf %112 : vector<8x32xf32> to vector<8x32xbf16>
    "tpu.trace_start"() <{level = 10 : i32, message = "qd,kd->qk"}> : () -> ()
    %cst_43 = arith.constant dense<0.000000e+00> : vector<8x8xf32>
    %114 = tpu.matmul %109, %111, %cst_43 {dimension_numbers = #tpu.dot_dimension_numbers<[1], [1], [0], [0], [0, 0, 1, 0], [], []>} : vector<8x32xbf16>, vector<8x32xbf16>, vector<8x8xf32> -> vector<8x8xf32>
    %cst_44 = arith.constant -1.000000e+09 : f32
    "tpu.trace_stop"() : () -> ()
    %115 = vector.broadcast %cst_44 : f32 to vector<8x8xf32>
    %116 = arith.select %29, %114, %115 : vector<8x8xi1>, vector<8x8xf32>
    %cst_45 = arith.constant dense<0xFF800000> : vector<8xf32>
    %117 = vector.multi_reduction <maximumf>, %116, %cst_45 [1] : vector<8x8xf32> to vector<8xf32>
    %118 = vector.shape_cast %117 : vector<8xf32> to vector<8x1xf32>
    %119 = vector.broadcast %118 : vector<8x1xf32> to vector<8x8xf32>
    %120 = arith.subf %116, %119 : vector<8x8xf32>
    %121 = math.exp %120 : vector<8x8xf32>
    %cst_46 = arith.constant dense<0.000000e+00> : vector<8xf32>
    %122 = vector.multi_reduction <add>, %121, %cst_46 [1] : vector<8x8xf32> to vector<8xf32>
    %123 = vector.shape_cast %122 : vector<8xf32> to vector<8x1xf32>
    %124 = tpu.reciprocal %123 {approx = true} : vector<8x1xf32> -> vector<8x1xf32>
    %125 = vector.broadcast %124 : vector<8x1xf32> to vector<8x8xf32>
    %126 = arith.mulf %121, %125 : vector<8x8xf32>
    %127 = arith.truncf %126 : vector<8x8xf32> to vector<8x8xbf16>
    %cst_47 = arith.constant dense<0.000000e+00> : vector<8x32xf32>
    %128 = tpu.matmul %127, %113, %cst_47 {dimension_numbers = #tpu.dot_dimension_numbers<[1], [0], [0], [1], [0, 0, 1, 1], [], []>} : vector<8x8xbf16>, vector<8x32xbf16>, vector<8x32xf32> -> vector<8x32xf32>
    %129 = arith.truncf %128 : vector<8x32xf32> to vector<8x32xbf16>
    %130 = vector.extract_strided_slice %31 {offsets = [96, 0], sizes = [32, 128], strides = [1, 1]} : vector<128x128xbf16> to vector<32x128xbf16>
    %cst_48 = arith.constant dense<0.000000e+00> : vector<8x128xf32>
    %131 = tpu.matmul %129, %130, %cst_48 {dimension_numbers = #tpu.dot_dimension_numbers<[1], [0], [0], [1], [0, 0, 1, 1], [], []>} : vector<8x32xbf16>, vector<32x128xbf16>, vector<8x128xf32> -> vector<8x128xf32>
    %132 = arith.addf %107, %131 : vector<8x128xf32>
    %133 = vector.broadcast %5 : vector<1x128xf32> to vector<8x128xf32>
    %134 = arith.addf %132, %133 : vector<8x128xf32>
    %135 = arith.addf %3, %134 : vector<8x128xf32>
    %cst_49 = arith.constant dense<0.000000e+00> : vector<8xf32>
    %136 = vector.multi_reduction <add>, %135, %cst_49 [1] : vector<8x128xf32> to vector<8xf32>
    %137 = vector.shape_cast %136 : vector<8xf32> to vector<8x1xf32>
    %cst_50 = arith.constant 1.280000e+02 : f32
    %138 = vector.broadcast %cst_50 : f32 to vector<8x1xf32>
    %139 = arith.divf %137, %138 : vector<8x1xf32>
    %140 = vector.broadcast %139 : vector<8x1xf32> to vector<8x128xf32>
    %141 = arith.subf %135, %140 : vector<8x128xf32>
    %142 = arith.mulf %141, %141 : vector<8x128xf32>
    %cst_51 = arith.constant dense<0.000000e+00> : vector<8xf32>
    %143 = vector.multi_reduction <add>, %142, %cst_51 [1] : vector<8x128xf32> to vector<8xf32>
    %144 = vector.shape_cast %143 : vector<8xf32> to vector<8x1xf32>
    %cst_52 = arith.constant 1.280000e+02 : f32
    %145 = vector.broadcast %cst_52 : f32 to vector<8x1xf32>
    %146 = arith.divf %144, %145 : vector<8x1xf32>
    %147 = vector.broadcast %139 : vector<8x1xf32> to vector<8x128xf32>
    %148 = arith.subf %135, %147 : vector<8x128xf32>
    %cst_53 = arith.constant 9.99999974E-6 : f32
    %149 = vector.broadcast %cst_53 : f32 to vector<8x1xf32>
    %150 = arith.addf %146, %149 : vector<8x1xf32>
    %151 = math.rsqrt %150 : vector<8x1xf32>
    %152 = vector.broadcast %151 : vector<8x1xf32> to vector<8x128xf32>
    %153 = arith.mulf %148, %152 : vector<8x128xf32>
    %154 = vector.broadcast %7 : vector<1x128xf32> to vector<8x128xf32>
    %155 = arith.mulf %153, %154 : vector<8x128xf32>
    %156 = vector.broadcast %9 : vector<1x128xf32> to vector<8x128xf32>
    %157 = arith.addf %155, %156 : vector<8x128xf32>
    %158 = arith.truncf %157 : vector<8x128xf32> to vector<8x128xbf16>
    %c0_54 = arith.constant 0 : index
    %c0_55 = arith.constant 0 : index
    %c0_56 = arith.constant 0 : index
    %159 = vector.load %arg6[%c0_54, %c0_55, %c0_56] : memref<1x128x256xbf16, #tpu.memory_space<vmem>>, vector<1x128x256xbf16>
    %160 = vector.shape_cast %159 : vector<1x128x256xbf16> to vector<128x256xbf16>
    %cst_57 = arith.constant dense<0.000000e+00> : vector<8x256xf32>
    %161 = tpu.matmul %158, %160, %cst_57 {dimension_numbers = #tpu.dot_dimension_numbers<[1], [0], [0], [1], [0, 0, 1, 1], [], []>} : vector<8x128xbf16>, vector<128x256xbf16>, vector<8x256xf32> -> vector<8x256xf32>
    %c0_58 = arith.constant 0 : index
    %c0_59 = arith.constant 0 : index
    %c0_60 = arith.constant 0 : index
    %162 = vector.load %arg7[%c0_58, %c0_59, %c0_60] : memref<1x1x256xf32, #tpu.memory_space<vmem>>, vector<1x1x256xf32>
    %163 = vector.shape_cast %162 : vector<1x1x256xf32> to vector<1x256xf32>
    %164 = vector.broadcast %163 : vector<1x256xf32> to vector<8x256xf32>
    %165 = arith.addf %161, %164 : vector<8x256xf32>
    %cst_61 = arith.constant 0.000000e+00 : f32
    %166 = vector.broadcast %cst_61 : f32 to vector<8x256xf32>
    %167 = arith.maximumf %165, %166 : vector<8x256xf32>
    %168 = arith.truncf %167 : vector<8x256xf32> to vector<8x256xbf16>
    %c0_62 = arith.constant 0 : index
    %c0_63 = arith.constant 0 : index
    %c0_64 = arith.constant 0 : index
    %169 = vector.load %arg8[%c0_62, %c0_63, %c0_64] : memref<1x256x128xbf16, #tpu.memory_space<vmem>>, vector<1x256x128xbf16>
    %170 = vector.shape_cast %169 : vector<1x256x128xbf16> to vector<256x128xbf16>
    %cst_65 = arith.constant dense<0.000000e+00> : vector<8x128xf32>
    %171 = tpu.matmul %168, %170, %cst_65 {dimension_numbers = #tpu.dot_dimension_numbers<[1], [0], [0], [1], [0, 0, 1, 1], [], []>} : vector<8x256xbf16>, vector<256x128xbf16>, vector<8x128xf32> -> vector<8x128xf32>
    %172 = vector.broadcast %11 : vector<1x128xf32> to vector<8x128xf32>
    %173 = arith.addf %171, %172 : vector<8x128xf32>
    %174 = arith.addf %157, %173 : vector<8x128xf32>
    %cst_66 = arith.constant dense<0.000000e+00> : vector<8xf32>
    %175 = vector.multi_reduction <add>, %174, %cst_66 [1] : vector<8x128xf32> to vector<8xf32>
    %176 = vector.shape_cast %175 : vector<8xf32> to vector<8x1xf32>
    %cst_67 = arith.constant 1.280000e+02 : f32
    %177 = vector.broadcast %cst_67 : f32 to vector<8x1xf32>
    %178 = arith.divf %176, %177 : vector<8x1xf32>
    %179 = vector.broadcast %178 : vector<8x1xf32> to vector<8x128xf32>
    %180 = arith.subf %174, %179 : vector<8x128xf32>
    %181 = arith.mulf %180, %180 : vector<8x128xf32>
    %cst_68 = arith.constant dense<0.000000e+00> : vector<8xf32>
    %182 = vector.multi_reduction <add>, %181, %cst_68 [1] : vector<8x128xf32> to vector<8xf32>
    %183 = vector.shape_cast %182 : vector<8xf32> to vector<8x1xf32>
    %cst_69 = arith.constant 1.280000e+02 : f32
    %184 = vector.broadcast %cst_69 : f32 to vector<8x1xf32>
    %185 = arith.divf %183, %184 : vector<8x1xf32>
    %186 = vector.broadcast %178 : vector<8x1xf32> to vector<8x128xf32>
    %187 = arith.subf %174, %186 : vector<8x128xf32>
    %cst_70 = arith.constant 9.99999974E-6 : f32
    %188 = vector.broadcast %cst_70 : f32 to vector<8x1xf32>
    %189 = arith.addf %185, %188 : vector<8x1xf32>
    %190 = math.rsqrt %189 : vector<8x1xf32>
    %191 = vector.broadcast %190 : vector<8x1xf32> to vector<8x128xf32>
    %192 = arith.mulf %187, %191 : vector<8x128xf32>
    %193 = vector.broadcast %13 : vector<1x128xf32> to vector<8x128xf32>
    %194 = arith.mulf %192, %193 : vector<8x128xf32>
    %195 = vector.broadcast %15 : vector<1x128xf32> to vector<8x128xf32>
    %196 = arith.addf %194, %195 : vector<8x128xf32>
    %c0_71 = arith.constant 0 : index
    %c0_72 = arith.constant 0 : index
    %197 = vector.load %arg11[%c0_71, %c0_72] : memref<8x128xf32, #tpu.memory_space<vmem>>, vector<8x128xf32>
    tpu.vector_store %arg11[%c0_71, %c0_72], %196 {strides = array<i32>} : memref<8x128xf32, #tpu.memory_space<vmem>>, vector<8x128xf32>,
    %c1_i32 = arith.constant 1 : i32
    %198 = arith.cmpi eq, %arg1, %c1_i32 : i32
    %199 = arith.extui %198 : i1 to i32
    %c0_i32_73 = arith.constant 0 : i32
    %200 = arith.cmpi ne, %199, %c0_i32_73 : i32
    scf.if %200 {
      %c0_74 = arith.constant 0 : index
      %c0_75 = arith.constant 0 : index
      %c0_76 = arith.constant 0 : index
      %201 = vector.load %arg10[%c0_74, %c0_75, %c0_76] : memref<1x8x128xf32, #tpu.memory_space<vmem>>, vector<1x8x128xf32>
      %202 = vector.shape_cast %201 : vector<1x8x128xf32> to vector<8x128xf32>
      %203 = vector.shape_cast %196 : vector<8x128xf32> to vector<1x8x128xf32>
      tpu.vector_store %arg10[%c0_74, %c0_75, %c0_76], %203 {strides = array<i32>} : memref<1x8x128xf32, #tpu.memory_space<vmem>>, vector<1x8x128xf32>,
    } else {
    }
    return
  }
  func.func @transform_0(%arg0: i32, %arg1: i32) -> (i32, i32, i32) {
    %c0_i32 = arith.constant 0 : i32
    %c0_i32_0 = arith.constant 0 : i32
    %c0_i32_1 = arith.constant 0 : i32
    return %arg0, %c0_i32, %c0_i32_0 : i32, i32, i32
  }
  func.func @transform_1(%arg0: i32, %arg1: i32) -> (i32, i32, i32) {
    %c0_i32 = arith.constant 0 : i32
    %c0_i32_0 = arith.constant 0 : i32
    %c0_i32_1 = arith.constant 0 : i32
    return %arg1, %c0_i32, %c0_i32_0 : i32, i32, i32
  }
  func.func @transform_2(%arg0: i32, %arg1: i32) -> (i32, i32, i32) {
    %c0_i32 = arith.constant 0 : i32
    %c0_i32_0 = arith.constant 0 : i32
    %c0_i32_1 = arith.constant 0 : i32
    return %arg1, %c0_i32, %c0_i32_0 : i32, i32, i32
  }
  func.func @transform_3(%arg0: i32, %arg1: i32) -> (i32, i32, i32) {
    %c0_i32 = arith.constant 0 : i32
    %c0_i32_0 = arith.constant 0 : i32
    %c0_i32_1 = arith.constant 0 : i32
    return %arg1, %c0_i32, %c0_i32_0 : i32, i32, i32
  }
  func.func @transform_4(%arg0: i32, %arg1: i32) -> (i32, i32, i32) {
    %c0_i32 = arith.constant 0 : i32
    %c0_i32_0 = arith.constant 0 : i32
    %c0_i32_1 = arith.constant 0 : i32
    return %arg1, %c0_i32, %c0_i32_0 : i32, i32, i32
  }
  func.func @transform_5(%arg0: i32, %arg1: i32) -> (i32, i32, i32) {
    %c0_i32 = arith.constant 0 : i32
    %c0_i32_0 = arith.constant 0 : i32
    %c0_i32_1 = arith.constant 0 : i32
    return %arg1, %c0_i32, %c0_i32_0 : i32, i32, i32
  }
  func.func @transform_6(%arg0: i32, %arg1: i32) -> (i32, i32, i32) {
    %c0_i32 = arith.constant 0 : i32
    %c0_i32_0 = arith.constant 0 : i32
    %c0_i32_1 = arith.constant 0 : i32
    return %arg1, %c0_i32, %c0_i32_0 : i32, i32, i32
  }
  func.func @transform_7(%arg0: i32, %arg1: i32) -> (i32, i32, i32) {
    %c0_i32 = arith.constant 0 : i32
    %c0_i32_0 = arith.constant 0 : i32
    %c0_i32_1 = arith.constant 0 : i32
    return %arg1, %c0_i32, %c0_i32_0 : i32, i32, i32
  }
  func.func @transform_8(%arg0: i32, %arg1: i32) -> (i32, i32, i32) {
    %c0_i32 = arith.constant 0 : i32
    %c0_i32_0 = arith.constant 0 : i32
    %c0_i32_1 = arith.constant 0 : i32
    return %arg0, %c0_i32, %c0_i32_0 : i32, i32, i32
  }
}

</mosaic_0001>

<llo_original>
// kernel: tpu_custom_call.1
$region0: #{tpu_custom_call.1}
  #allocation0 [shape = 'u32[]', space=smem, size = 0x4, offset = 0x4, fixed_abs, tag = 'smem constant byte address 0x4 - core index']
  #allocation1 [shape = 'u32[144,128]{1,0:T(1,128)}', space=vmem, size = 0x12000, scoped, tag = 'internal scratch']
  #allocation2 [shape = 'f32[8,128]{1,0:T(8,128)}', space=vmem, size = 0x1000, scoped, tag = 'scratch operand']
  %s0 = inlined_call_operand.hbm [shape: f32[2,8,128], index: 0, kind: input, shape index: {}]
  %s1 = inlined_call_operand.hbm [shape: bf16[2,128,384], index: 1, kind: input, shape index: {}]
  %s2 = inlined_call_operand.vmem [shape: f32[2,1,384], index: 2, kind: input, shape index: {}]
  %s3 = inlined_call_operand.hbm [shape: bf16[2,128,128], index: 3, kind: input, shape index: {}]
  %s4 = inlined_call_operand.hbm [shape: bf16[2,128,256], index: 4, kind: input, shape index: {}]
  %s5 = inlined_call_operand.vmem [shape: f32[2,1,256], index: 5, kind: input, shape index: {}]
  %s6 = inlined_call_operand.hbm [shape: bf16[2,256,128], index: 6, kind: input, shape index: {}]
  %s7 = inlined_call_operand.vmem [shape: f32[2,8,128], index: 7, kind: input, shape index: {}]
  %s8 = inlined_call_operand.hbm [shape: f32[2,8,128], index: 8, kind: output, shape index: {}]
  %s9 = sld [smem:[#allocation0]]
  $region93: #{tpu_custom_call.1} parent=0
    _
  %s11 = ssub.s32 1, %s9
  %s12 = scalar_select 0, %s11, %s9
  $region1: #{tpu_custom_call.1} parent=0
    #allocation3 [shape = 'u8[8192]{0}', space=vmem, size = 0x2000, scoped, tag = 'input window, operand 0']
    #allocation4 [shape = 's32[2]{0}', space=sflag, size = 0x8, scoped, tag = 'scoped memory for tpu_custom_call.1']
    #allocation5 [shape = 's32[2]{0}', space=sflag, size = 0x8, scoped, tag = 'scoped memory for tpu_custom_call.1']
    #allocation6 [shape = 'u8[196608]{0}', space=vmem, size = 0x30000, scoped, tag = 'input window, operand 1']
    #allocation7 [shape = 's32[2]{0}', space=sflag, size = 0x8, scoped, tag = 'scoped memory for tpu_custom_call.1']
    #allocation8 [shape = 'u8[65536]{0}', space=vmem, size = 0x10000, scoped, tag = 'input window, operand 3']
    #allocation9 [shape = 'u8[131072]{0}', space=vmem, size = 0x20000, scoped, tag = 'input window, operand 4']
    #allocation10 [shape = 's32[2]{0}', space=sflag, size = 0x8, scoped, tag = 'scoped memory for tpu_custom_call.1']
    #allocation11 [shape = 'u8[131072]{0}', space=vmem, size = 0x20000, scoped, tag = 'input window, operand 6']
    #allocation12 [shape = 'u8[8192]{0}', space=vmem, size = 0x2000, scoped, tag = 'output window, operand 0']
    %13 = vsyncpa [#allocation4], 0
    %s14 = scalar_lea.sflag [#allocation4], 1
    %15 = vsyncpa %s14, 0
    %16 = vsyncpa [#allocation7], 0
    %s17 = scalar_lea.sflag [#allocation7], 1
    %18 = vsyncpa %s17, 0
    %19 = vsyncpa [#allocation10], 0
    %s20 = scalar_lea.sflag [#allocation10], 1
    %21 = vsyncpa %s20, 0
    %22 = vsyncpa [#allocation5], 0
    %s23 = scalar_lea.sflag [#allocation5], 1
    %24 = vsyncpa %s23, 0
    loop: start=0, step=1, limit=6
    $region2: #{tpu_custom_call.1} parent=1 // loop_pre_header
      _
    $region3: #{tpu_custom_call.1} parent=1 // loop_header
      %s26 = sphi 0, %s30
      %p27 = scmp.ge.s32.totalorder %s26, 6
      %s33 = sphi 0, %s45
      %s34 = sphi 0, %s41
      %s35 = sphi 0, %s33
      %s36 = sphi 0, %s34
      %s37 = sphi 0, %s35
      %s38 = sphi 0, %s36
      %s48 = sphi 0, %s50
      %s51 = sphi 0, %s48
      %s52 = sphi 0, %s51
      %s68 = sphi 0, %s52
      %s74 = sphi 0, %s76
      %s77 = sphi 0, %s74
      %s78 = sphi 0, %s77
      %s94 = sphi 0, %s78
      %s100 = sphi 0, %s102
      %s103 = sphi 0, %s100
      %s104 = sphi 0, %s103
      %s120 = sphi 0, %s104
      %s126 = sphi 0, %s128
      %s129 = sphi 0, %s126
      %s130 = sphi 0, %s129
      %s146 = sphi 0, %s130
      %s152 = sphi 0, %s154
      %s155 = sphi 0, %s152
      %s156 = sphi 0, %s155
      %s172 = sphi 0, %s156
      %s178 = sphi 0, %s180
      %s181 = sphi 0, %s178
      %s182 = sphi 0, %s181
      %s198 = sphi 0, %s182
      %s204 = sphi 0, %s206
      %s207 = sphi 0, %s204
      %s208 = sphi 0, %s207
      %s224 = sphi 0, %s208
      %s230 = sphi 0, %s232
      %s233 = sphi 0, %s230
      %s234 = sphi 0, %s233
      %s250 = sphi 0, %s234
      %s256 = sphi 0, %s258
      %s259 = sphi 0, %s256
      %s260 = sphi 0, %s259
      %s276 = sphi 0, %s260
    $region4: #{tpu_custom_call.1} parent=1 // loop_header_branch
      %29 = sbr.rel (%p27) target = $region8
    $region5: #{tpu_custom_call.1} parent=1 // loop_body
      %s31 = ssub.s32 %s26, 1
      %s32 = ssub.s32 %s26, 2
      %s39 = sadd.s32 1, %s34
      %p40 = scmp.ge.s32.totalorder %s39, 2
      %s41 = scalar_select %p40, 0, %s39
      %s42 = sadd.s32 1, %s33
      %s43 = scalar_select %p40, %s42, %s33
      %p44 = scmp.ge.s32.totalorder %s43, 2
      %s45 = scalar_select %p44, 0, %s43
      %s46 = ssub.s32 %s33, %s45
      %p47 = scmp.eq.s32.totalorder %s46, 0
      %s49 = sadd.s32 %s48, 1
      %s50 = scalar_select %p47, %s48, %s49
      %p53 = pneg %p47
      %p54 = scmp.eq.s32.totalorder %s26, 3
      %p55 = por %p53, %p54
      %p56 = scmp.ne.s32.totalorder %s48, %s51
      %p57 = scmp.eq.s32.totalorder %s26, 0
      %p58 = por %p56, %p57
      %p59 = scmp.ne.s32.totalorder %s48, %s51
      %p60 = scmp.eq.s32.totalorder %s31, 3
      %p61 = por %p59, %p60
      %p62 = scmp.ne.s32.totalorder %s51, %s52
      %p63 = scmp.eq.s32.totalorder %s31, 0
      %p64 = por %p62, %p63
      %p65 = scmp.ne.s32.totalorder %s51, %s52
      %p66 = scmp.eq.s32.totalorder %s32, 3
      %p67 = por %p65, %p66
      %p69 = scmp.ne.s32.totalorder %s52, %s68
      %p70 = scmp.eq.s32.totalorder %s32, 0
      %p71 = por %p69, %p70
      %s72 = ssub.s32 %s34, %s41
      %p73 = scmp.eq.s32.totalorder %s72, 0
      %s75 = sadd.s32 %s74, 1
      %s76 = scalar_select %p73, %s74, %s75
      %p79 = pneg %p73
      %p80 = scmp.eq.s32.totalorder %s26, 3
      %p81 = por %p79, %p80
      %p82 = scmp.ne.s32.totalorder %s74, %s77
      %p83 = scmp.eq.s32.totalorder %s26, 0
      %p84 = por %p82, %p83
      %p85 = scmp.ne.s32.totalorder %s74, %s77
      %p86 = scmp.eq.s32.totalorder %s31, 3
      %p87 = por %p85, %p86
      %p88 = scmp.ne.s32.totalorder %s77, %s78
      %p89 = scmp.eq.s32.totalorder %s31, 0
      %p90 = por %p88, %p89
      %p91 = scmp.ne.s32.totalorder %s77, %s78
      %p92 = scmp.eq.s32.totalorder %s32, 3
      %p93 = por %p91, %p92
      %p95 = scmp.ne.s32.totalorder %s78, %s94
      %p96 = scmp.eq.s32.totalorder %s32, 0
      %p97 = por %p95, %p96
      %s98 = ssub.s32 %s34, %s41
      %p99 = scmp.eq.s32.totalorder %s98, 0
      %s101 = sadd.s32 %s100, 1
      %s102 = scalar_select %p99, %s100, %s101
      %p105 = pneg %p99
      %p106 = scmp.eq.s32.totalorder %s26, 3
      %p107 = por %p105, %p106
      %p108 = scmp.ne.s32.totalorder %s100, %s103
      %p109 = scmp.eq.s32.totalorder %s26, 0
      %p110 = por %p108, %p109
      %p111 = scmp.ne.s32.totalorder %s100, %s103
      %p112 = scmp.eq.s32.totalorder %s31, 3
      %p113 = por %p111, %p112
      %p114 = scmp.ne.s32.totalorder %s103, %s104
      %p115 = scmp.eq.s32.totalorder %s31, 0
      %p116 = por %p114, %p115
      %p117 = scmp.ne.s32.totalorder %s103, %s104
      %p118 = scmp.eq.s32.totalorder %s32, 3
      %p119 = por %p117, %p118
      %p121 = scmp.ne.s32.totalorder %s104, %s120
      %p122 = scmp.eq.s32.totalorder %s32, 0
      %p123 = por %p121, %p122
      %s124 = ssub.s32 %s34, %s41
      %p125 = scmp.eq.s32.totalorder %s124, 0
      %s127 = sadd.s32 %s126, 1
      %s128 = scalar_select %p125, %s126, %s127
      %p131 = pneg %p125
      %p132 = scmp.eq.s32.totalorder %s26, 3
      %p133 = por %p131, %p132
      %p134 = scmp.ne.s32.totalorder %s126, %s129
      %p135 = scmp.eq.s32.totalorder %s26, 0
      %p136 = por %p134, %p135
      %p137 = scmp.ne.s32.totalorder %s126, %s129
      %p138 = scmp.eq.s32.totalorder %s31, 3
      %p139 = por %p137, %p138
      %p140 = scmp.ne.s32.totalorder %s129, %s130
      %p141 = scmp.eq.s32.totalorder %s31, 0
      %p142 = por %p140, %p141
      %p143 = scmp.ne.s32.totalorder %s129, %s130
      %p144 = scmp.eq.s32.totalorder %s32, 3
      %p145 = por %p143, %p144
      %p147 = scmp.ne.s32.totalorder %s130, %s146
      %p148 = scmp.eq.s32.totalorder %s32, 0
      %p149 = por %p147, %p148
      %s150 = ssub.s32 %s34, %s41
      %p151 = scmp.eq.s32.totalorder %s150, 0
      %s153 = sadd.s32 %s152, 1
      %s154 = scalar_select %p151, %s152, %s153
      %p157 = pneg %p151
      %p158 = scmp.eq.s32.totalorder %s26, 3
      %p159 = por %p157, %p158
      %p160 = scmp.ne.s32.totalorder %s152, %s155
      %p161 = scmp.eq.s32.totalorder %s26, 0
      %p162 = por %p160, %p161
      %p163 = scmp.ne.s32.totalorder %s152, %s155
      %p164 = scmp.eq.s32.totalorder %s31, 3
      %p165 = por %p163, %p164
      %p166 = scmp.ne.s32.totalorder %s155, %s156
      %p167 = scmp.eq.s32.totalorder %s31, 0
      %p168 = por %p166, %p167
      %p169 = scmp.ne.s32.totalorder %s155, %s156
      %p170 = scmp.eq.s32.totalorder %s32, 3
      %p171 = por %p169, %p170
      %p173 = scmp.ne.s32.totalorder %s156, %s172
      %p174 = scmp.eq.s32.totalorder %s32, 0
      %p175 = por %p173, %p174
      %s176 = ssub.s32 %s34, %s41
      %p177 = scmp.eq.s32.totalorder %s176, 0
      %s179 = sadd.s32 %s178, 1
      %s180 = scalar_select %p177, %s178, %s179
      %p183 = pneg %p177
      %p184 = scmp.eq.s32.totalorder %s26, 3
      %p185 = por %p183, %p184
      %p186 = scmp.ne.s32.totalorder %s178, %s181
      %p187 = scmp.eq.s32.totalorder %s26, 0
      %p188 = por %p186, %p187
      %p189 = scmp.ne.s32.totalorder %s178, %s181
      %p190 = scmp.eq.s32.totalorder %s31, 3
      %p191 = por %p189, %p190
      %p192 = scmp.ne.s32.totalorder %s181, %s182
      %p193 = scmp.eq.s32.totalorder %s31, 0
      %p194 = por %p192, %p193
      %p195 = scmp.ne.s32.totalorder %s181, %s182
      %p196 = scmp.eq.s32.totalorder %s32, 3
      %p197 = por %p195, %p196
      %p199 = scmp.ne.s32.totalorder %s182, %s198
      %p200 = scmp.eq.s32.totalorder %s32, 0
      %p201 = por %p199, %p200
      %s202 = ssub.s32 %s34, %s41
      %p203 = scmp.eq.s32.totalorder %s202, 0
      %s205 = sadd.s32 %s204, 1
      %s206 = scalar_select %p203, %s204, %s205
      %p209 = pneg %p203
      %p210 = scmp.eq.s32.totalorder %s26, 3
      %p211 = por %p209, %p210
      %p212 = scmp.ne.s32.totalorder %s204, %s207
      %p213 = scmp.eq.s32.totalorder %s26, 0
      %p214 = por %p212, %p213
      %p215 = scmp.ne.s32.totalorder %s204, %s207
      %p216 = scmp.eq.s32.totalorder %s31, 3
      %p217 = por %p215, %p216
      %p218 = scmp.ne.s32.totalorder %s207, %s208
      %p219 = scmp.eq.s32.totalorder %s31, 0
      %p220 = por %p218, %p219
      %p221 = scmp.ne.s32.totalorder %s207, %s208
      %p222 = scmp.eq.s32.totalorder %s32, 3
      %p223 = por %p221, %p222
      %p225 = scmp.ne.s32.totalorder %s208, %s224
      %p226 = scmp.eq.s32.totalorder %s32, 0
      %p227 = por %p225, %p226
      %s228 = ssub.s32 %s34, %s41
      %p229 = scmp.eq.s32.totalorder %s228, 0
      %s231 = sadd.s32 %s230, 1
      %s232 = scalar_select %p229, %s230, %s231
      %p235 = pneg %p229
      %p236 = scmp.eq.s32.totalorder %s26, 3
      %p237 = por %p235, %p236
      %p238 = scmp.ne.s32.totalorder %s230, %s233
      %p239 = scmp.eq.s32.totalorder %s26, 0
      %p240 = por %p238, %p239
      %p241 = scmp.ne.s32.totalorder %s230, %s233
      %p242 = scmp.eq.s32.totalorder %s31, 3
      %p243 = por %p241, %p242
      %p244 = scmp.ne.s32.totalorder %s233, %s234
      %p245 = scmp.eq.s32.totalorder %s31, 0
      %p246 = por %p244, %p245
      %p247 = scmp.ne.s32.totalorder %s233, %s234
      %p248 = scmp.eq.s32.totalorder %s32, 3
      %p249 = por %p247, %p248
      %p251 = scmp.ne.s32.totalorder %s234, %s250
      %p252 = scmp.eq.s32.totalorder %s32, 0
      %p253 = por %p251, %p252
      %s254 = ssub.s32 %s33, %s45
      %p255 = scmp.eq.s32.totalorder %s254, 0
      %s257 = sadd.s32 %s256, 1
      %s258 = scalar_select %p255, %s256, %s257
      %p261 = pneg %p255
      %p262 = scmp.eq.s32.totalorder %s26, 3
      %p263 = por %p261, %p262
      %p264 = scmp.ne.s32.totalorder %s256, %s259
      %p265 = scmp.eq.s32.totalorder %s26, 0
      %p266 = por %p264, %p265
      %p267 = scmp.ne.s32.totalorder %s256, %s259
      %p268 = scmp.eq.s32.totalorder %s31, 3
      %p269 = por %p267, %p268
      %p270 = scmp.ne.s32.totalorder %s259, %s260
      %p271 = scmp.eq.s32.totalorder %s31, 0
      %p272 = por %p270, %p271
      %p273 = scmp.ne.s32.totalorder %s259, %s260
      %p274 = scmp.eq.s32.totalorder %s32, 3
      %p275 = por %p273, %p274
      %p277 = scmp.ne.s32.totalorder %s260, %s276
      %p278 = scmp.eq.s32.totalorder %s32, 0
      %p279 = por %p277, %p278
      %p280 = scmp.le.s32.totalorder 1, %s26
      %p281 = scmp.lt.s32.totalorder %s26, 5
      %p282 = pnand %p280, %p281
      %p283 = pneg %p282
      // Predicated region
      $region9: #{tpu_custom_call.1} parent=5 // pred_check
        _
      $region10: #{tpu_custom_call.1} parent=5 // pred_check_branch
        %285 = sbr.rel (%p282) target = $region12
      $region11: #{tpu_custom_call.1} parent=5 // pred_region
        %s286 = ssub.s32 %s26, 1
      $region12: #{tpu_custom_call.1} parent=5 // pred_fallthru
        _
      %p287 = scmp.lt.s32.totalorder %s26, 4
      // Predicated region
      $region13: #{tpu_custom_call.1} parent=5 // pred_check
        %p288 = pneg %p287
      $region14: #{tpu_custom_call.1} parent=5 // pred_check_branch
        %290 = sbr.rel (%p288) target = $region16
      $region15: #{tpu_custom_call.1} parent=5 // pred_region
        // Predicated region
        $region17: #{tpu_custom_call.1} parent=15 // pred_check
          %p291 = pneg %p58
        $region18: #{tpu_custom_call.1} parent=15 // pred_check_branch
          %293 = sbr.rel (%p291) target = $region20
        $region19: #{tpu_custom_call.1} parent=15 // pred_region
          %s294 = sand.u32 %s48, 1
          %s295 = scalar_lea.sflag [#allocation4], %s294
          %s296 = sand.u32 %s48, 1
          %s297 = smul.addr %s296, 8
          %s298 = scalar_lea.vmem [#allocation3], %s297
          %s300 = ssub.s32 128, 128
          %301 = vsyncadd %s295, %s300
          %s302 = smul.addr %s33, 128
          %s303 = scalar_lea.hbm %s0, %s302
          %s305 = sshll.u32 %s298, 4
          %s306 = int_to_ptr.vmem [resolvable:$true] %s305
          %308 = dma.hbm_to_vmem [thread:$0]  %s303, 128, %s306, %s295
        $region20: #{tpu_custom_call.1} parent=15 // pred_fallthru
          _
        // Predicated region
        $region21: #{tpu_custom_call.1} parent=15 // pred_check
          %p309 = pneg %p84
        $region22: #{tpu_custom_call.1} parent=15 // pred_check_branch
          %311 = sbr.rel (%p309) target = $region24
        $region23: #{tpu_custom_call.1} parent=15 // pred_region
          %s312 = sand.u32 %s26, 1
          %s313 = scalar_lea.sflag [#allocation7], %s312
          %s314 = sand.u32 %s74, 1
          %s315 = smul.addr %s314, 192
          %s316 = scalar_lea.vmem [#allocation6], %s315
          %s318 = ssub.s32 3072, 3072
          %319 = vsyncadd %s313, %s318
          %s320 = smul.addr %s34, 48
          %s321 = smul.addr %s320, 64
          %s322 = scalar_lea.hbm %s1, %s321
          %s323 = sshll.u32 %s316, 4
          %s324 = int_to_ptr.vmem [resolvable:$true] %s323
          %329 = dma.hbm_to_vmem [thread:$0]  %s322, 3072, %s324, %s313, 192, 192, 12
        $region24: #{tpu_custom_call.1} parent=15 // pred_fallthru
          _
        // Predicated region
        $region25: #{tpu_custom_call.1} parent=15 // pred_check
          %p330 = pneg %p110
        $region26: #{tpu_custom_call.1} parent=15 // pred_check_branch
          %332 = sbr.rel (%p330) target = $region28
        $region27: #{tpu_custom_call.1} parent=15 // pred_region
          %p333 = scmp.lt.s32.totalorder %s34, 1
          %s334 = scalar_select %p333, %s34, 1
          %s335 = smul.addr %s334, 3
          %s336 = scalar_lea.vmem %s2, %s335
        $region28: #{tpu_custom_call.1} parent=15 // pred_fallthru
          _
        // Predicated region
        $region29: #{tpu_custom_call.1} parent=15 // pred_check
          %p337 = pneg %p136
        $region30: #{tpu_custom_call.1} parent=15 // pred_check_branch
          %339 = sbr.rel (%p337) target = $region32
        $region31: #{tpu_custom_call.1} parent=15 // pred_region
          %s340 = sand.u32 %s26, 1
          %s341 = scalar_lea.sflag [#allocation7], %s340
          %s342 = sand.u32 %s126, 1
          %s343 = smul.addr %s342, 64
          %s344 = scalar_lea.vmem [#allocation8], %s343
          %s346 = ssub.s32 1024, 1024
          %347 = vsyncadd %s341, %s346
          %s348 = smul.addr %s34, 16
          %s349 = smul.addr %s348, 64
          %s350 = scalar_lea.hbm %s3, %s349
          %s351 = sshll.u32 %s344, 4
          %s352 = int_to_ptr.vmem [resolvable:$true] %s351
          %357 = dma.hbm_to_vmem [thread:$0]  %s350, 1024, %s352, %s341, 64, 64, 4
        $region32: #{tpu_custom_call.1} parent=15 // pred_fallthru
          _
        // Predicated region
        $region33: #{tpu_custom_call.1} parent=15 // pred_check
          %p358 = pneg %p162
        $region34: #{tpu_custom_call.1} parent=15 // pred_check_branch
          %360 = sbr.rel (%p358) target = $region36
        $region35: #{tpu_custom_call.1} parent=15 // pred_region
          %s361 = sand.u32 %s26, 1
          %s362 = scalar_lea.sflag [#allocation10], %s361
          %s363 = sand.u32 %s152, 1
          %s364 = smul.addr %s363, 128
          %s365 = scalar_lea.vmem [#allocation9], %s364
          %s367 = ssub.s32 2048, 2048
          %368 = vsyncadd %s362, %s367
          %s369 = smul.addr %s34, 32
          %s370 = smul.addr %s369, 64
          %s371 = scalar_lea.hbm %s4, %s370
          %s372 = sshll.u32 %s365, 4
          %s373 = int_to_ptr.vmem [resolvable:$true] %s372
          %378 = dma.hbm_to_vmem [thread:$0]  %s371, 2048, %s373, %s362, 128, 128, 8
        $region36: #{tpu_custom_call.1} parent=15 // pred_fallthru
          _
        // Predicated region
        $region37: #{tpu_custom_call.1} parent=15 // pred_check
          %p379 = pneg %p188
        $region38: #{tpu_custom_call.1} parent=15 // pred_check_branch
          %381 = sbr.rel (%p379) target = $region40
        $region39: #{tpu_custom_call.1} parent=15 // pred_region
          %p382 = scmp.lt.s32.totalorder %s34, 1
          %s383 = scalar_select %p382, %s34, 1
          %s384 = smul.addr %s383, 2
          %s385 = scalar_lea.vmem %s5, %s384
        $region40: #{tpu_custom_call.1} parent=15 // pred_fallthru
          _
        // Predicated region
        $region41: #{tpu_custom_call.1} parent=15 // pred_check
          %p386 = pneg %p214
        $region42: #{tpu_custom_call.1} parent=15 // pred_check_branch
          %388 = sbr.rel (%p386) target = $region44
        $region43: #{tpu_custom_call.1} parent=15 // pred_region
          %s389 = sand.u32 %s26, 1
          %s390 = scalar_lea.sflag [#allocation10], %s389
          %s391 = sand.u32 %s204, 1
          %s392 = smul.addr %s391, 128
          %s393 = scalar_lea.vmem [#allocation11], %s392
          %s395 = ssub.s32 2048, 2048
          %396 = vsyncadd %s390, %s395
          %s397 = smul.addr %s34, 32
          %s398 = smul.addr %s397, 64
          %s399 = scalar_lea.hbm %s6, %s398
          %s400 = sshll.u32 %s393, 4
          %s401 = int_to_ptr.vmem [resolvable:$true] %s400
          %406 = dma.hbm_to_vmem [thread:$0]  %s399, 2048, %s401, %s390, 64, 64, 4
        $region44: #{tpu_custom_call.1} parent=15 // pred_fallthru
          _
        // Predicated region
        $region45: #{tpu_custom_call.1} parent=15 // pred_check
          %p407 = pneg %p240
        $region46: #{tpu_custom_call.1} parent=15 // pred_check_branch
          %409 = sbr.rel (%p407) target = $region48
        $region47: #{tpu_custom_call.1} parent=15 // pred_region
          %p410 = scmp.lt.s32.totalorder %s34, 1
          %s411 = scalar_select %p410, %s34, 1
          %s412 = smul.addr %s411, 8
          %s413 = scalar_lea.vmem %s7, %s412
        $region48: #{tpu_custom_call.1} parent=15 // pred_fallthru
          _
      $region16: #{tpu_custom_call.1} parent=5 // pred_fallthru
        _
      %p414 = scmp.le.s32.totalorder 1, %s26
      %p415 = scmp.lt.s32.totalorder %s26, 5
      %p416 = pnand %p414, %p415
      %p417 = pneg %p416
      // Predicated region
      $region49: #{tpu_custom_call.1} parent=5 // pred_check
        _
      $region50: #{tpu_custom_call.1} parent=5 // pred_check_branch
        %419 = sbr.rel (%p416) target = $region52
      $region51: #{tpu_custom_call.1} parent=5 // pred_region
        %s420 = ssub.s32 %s26, 1
        %s421 = sand.u32 %s51, 1
        %s422 = scalar_lea.sflag [#allocation4], %s421
        %s423 = sand.u32 %s51, 1
        %s424 = smul.addr %s423, 8
        %s425 = scalar_lea.vmem [#allocation3], %s424
        // Predicated region
        $region53: #{tpu_custom_call.1} parent=51 // pred_check
          %p426 = pneg %p64
        $region54: #{tpu_custom_call.1} parent=51 // pred_check_branch
          %428 = sbr.rel (%p426) target = $region56
        $region55: #{tpu_custom_call.1} parent=51 // pred_region
          %429 = dma.done %s422, 128
        $region56: #{tpu_custom_call.1} parent=51 // pred_fallthru
          _
        %s430 = sand.u32 %s31, 1
        %s431 = scalar_lea.sflag [#allocation7], %s430
        %s432 = sand.u32 %s77, 1
        %s433 = smul.addr %s432, 192
        %s434 = scalar_lea.vmem [#allocation6], %s433
        // Predicated region
        $region57: #{tpu_custom_call.1} parent=51 // pred_check
          %p435 = pneg %p90
        $region58: #{tpu_custom_call.1} parent=51 // pred_check_branch
          %437 = sbr.rel (%p435) target = $region60
        $region59: #{tpu_custom_call.1} parent=51 // pred_region
          %438 = dma.done %s431, 3072
        $region60: #{tpu_custom_call.1} parent=51 // pred_fallthru
          _
        %s439 = sand.u32 %s31, 1
        %s440 = scalar_lea.sflag [#allocation7], %s439
        %s441 = sand.u32 %s129, 1
        %s442 = smul.addr %s441, 64
        %s443 = scalar_lea.vmem [#allocation8], %s442
        // Predicated region
        $region61: #{tpu_custom_call.1} parent=51 // pred_check
          %p444 = pneg %p142
        $region62: #{tpu_custom_call.1} parent=51 // pred_check_branch
          %446 = sbr.rel (%p444) target = $region64
        $region63: #{tpu_custom_call.1} parent=51 // pred_region
          %447 = dma.done %s440, 1024
        $region64: #{tpu_custom_call.1} parent=51 // pred_fallthru
          _
        %s448 = sand.u32 %s31, 1
        %s449 = scalar_lea.sflag [#allocation10], %s448
        %s450 = sand.u32 %s155, 1
        %s451 = smul.addr %s450, 128
        %s452 = scalar_lea.vmem [#allocation9], %s451
        // Predicated region
        $region65: #{tpu_custom_call.1} parent=51 // pred_check
          %p453 = pneg %p168
        $region66: #{tpu_custom_call.1} parent=51 // pred_check_branch
          %455 = sbr.rel (%p453) target = $region68
        $region67: #{tpu_custom_call.1} parent=51 // pred_region
          %456 = dma.done %s449, 2048
        $region68: #{tpu_custom_call.1} parent=51 // pred_fallthru
          _
        %s457 = sand.u32 %s31, 1
        %s458 = scalar_lea.sflag [#allocation10], %s457
        %s459 = sand.u32 %s207, 1
        %s460 = smul.addr %s459, 128
        %s461 = scalar_lea.vmem [#allocation11], %s460
        // Predicated region
        $region69: #{tpu_custom_call.1} parent=51 // pred_check
          %p462 = pneg %p220
        $region70: #{tpu_custom_call.1} parent=51 // pred_check_branch
          %464 = sbr.rel (%p462) target = $region72
        $region71: #{tpu_custom_call.1} parent=51 // pred_region
          %465 = dma.done %s458, 2048
        $region72: #{tpu_custom_call.1} parent=51 // pred_fallthru
          _
        %s466 = sand.u32 %s51, 1
        %s467 = scalar_lea.sflag [#allocation4], %s466
        %s468 = sand.u32 %s51, 1
        %s469 = smul.addr %s468, 8
        %s470 = scalar_lea.vmem [#allocation3], %s469
        %p471 = pneg %p64
        %p472 = pneg %p61
        %s473 = sand.u32 %s31, 1
        %s474 = scalar_lea.sflag [#allocation7], %s473
        %s475 = sand.u32 %s77, 1
        %s476 = smul.addr %s475, 192
        %s477 = scalar_lea.vmem [#allocation6], %s476
        %p478 = pneg %p90
        %p479 = pneg %p87
        %p480 = scmp.lt.s32.totalorder %s36, 1
        %s481 = scalar_select %p480, %s36, 1
        %s482 = smul.addr %s481, 3
        %s483 = scalar_lea.vmem %s2, %s482
        %p484 = pneg %p116
        %p485 = pneg %p113
        %s486 = sand.u32 %s31, 1
        %s487 = scalar_lea.sflag [#allocation7], %s486
        %s488 = sand.u32 %s129, 1
        %s489 = smul.addr %s488, 64
        %s490 = scalar_lea.vmem [#allocation8], %s489
        %p491 = pneg %p142
        %p492 = pneg %p139
        %s493 = sand.u32 %s31, 1
        %s494 = scalar_lea.sflag [#allocation10], %s493
        %s495 = sand.u32 %s155, 1
        %s496 = smul.addr %s495, 128
        %s497 = scalar_lea.vmem [#allocation9], %s496
        %p498 = pneg %p168
        %p499 = pneg %p165
        %p500 = scmp.lt.s32.totalorder %s36, 1
        %s501 = scalar_select %p500, %s36, 1
        %s502 = smul.addr %s501, 2
        %s503 = scalar_lea.vmem %s5, %s502
        %p504 = pneg %p194
        %p505 = pneg %p191
        %s506 = sand.u32 %s31, 1
        %s507 = scalar_lea.sflag [#allocation10], %s506
        %s508 = sand.u32 %s207, 1
        %s509 = smul.addr %s508, 128
        %s510 = scalar_lea.vmem [#allocation11], %s509
        %p511 = pneg %p220
        %p512 = pneg %p217
        %p513 = scmp.lt.s32.totalorder %s36, 1
        %s514 = scalar_select %p513, %s36, 1
        %s515 = smul.addr %s514, 8
        %s516 = scalar_lea.vmem %s7, %s515
        %p517 = pneg %p246
        %p518 = pneg %p243
        %p519 = pneg %p272
        %p520 = pneg %p269
        %s521 = sand.u32 %s259, 1
        %s522 = scalar_lea.sflag [#allocation5], %s521
        %s523 = sand.u32 %s259, 1
        %s524 = smul.addr %s523, 8
        %s525 = scalar_lea.vmem [#allocation12], %s524
        %p526 = scmp.lt.s32.totalorder %s36, 1
        %s527 = scalar_select %p526, %s36, 1
        %s528 = smul.addr %s527, 3
        %s529 = scalar_lea.vmem %s2, %s528
        %p530 = scmp.lt.s32.totalorder %s36, 1
        %s531 = scalar_select %p530, %s36, 1
        %s532 = smul.addr %s531, 2
        %s533 = scalar_lea.vmem %s5, %s532
        %p534 = scmp.lt.s32.totalorder %s36, 1
        %s535 = scalar_select %p534, %s36, 1
        %s536 = smul.addr %s535, 8
        %s537 = scalar_lea.vmem %s7, %s536
        %p539 = scmp.eq.s32.totalorder %s36, 0
        // Predicated region
        $region73: #{tpu_custom_call.1} parent=51 // pred_check
          %p540 = pneg %p539
        $region74: #{tpu_custom_call.1} parent=51 // pred_check_branch
          %542 = sbr.rel (%p540) target = $region76
        $region75: #{tpu_custom_call.1} parent=51 // pred_region
          %v543 = vld [vmem:[%s425] sm:$0xff]
          %544 = vst [vmem:[#allocation2] sm:$0xff] %v543
        $region76: #{tpu_custom_call.1} parent=51 // pred_fallthru
          _
        %v545 = vld [vmem:[#allocation2] sm:$0xff]
        %v546 = vld [vmem:[%s537] sm:$0x1]
        %v547 = vld [vmem:[%s537 + $0x1] sm:$0x1]
        %v548 = vld [vmem:[%s537 + $0x2] sm:$0x1]
        %v549 = vld [vmem:[%s537 + $0x3] sm:$0x1]
        %v550 = vld [vmem:[%s537 + $0x4] sm:$0x1]
        %v551 = vld [vmem:[%s537 + $0x5] sm:$0x1]
        %v552 = vpack.c.bf16 %v545, %v545
        %v553 = vld [vmem:[%s434] sm:$0xff]
        %v554 = vld [vmem:[%s434 + $0x8] sm:$0xf]
        %v555 = vld [vmem:[%s434 + $0xc] sm:$0xff]
        %v556 = vld [vmem:[%s434 + $0x14] sm:$0xf]
        %v557 = vld [vmem:[%s434 + $0x18] sm:$0xff]
        %v558 = vld [vmem:[%s434 + $0x20] sm:$0xf]
        %v559 = vld [vmem:[%s434 + $0x24] sm:$0xff]
        %v560 = vld [vmem:[%s434 + $0x2c] sm:$0xf]
        %v561 = vld [vmem:[%s434 + $0x30] sm:$0xff]
        %v562 = vld [vmem:[%s434 + $0x38] sm:$0xf]
        %v563 = vld [vmem:[%s434 + $0x3c] sm:$0xff]
        %v564 = vld [vmem:[%s434 + $0x44] sm:$0xf]
        %v565 = vld [vmem:[%s434 + $0x48] sm:$0xff]
        %v566 = vld [vmem:[%s434 + $0x50] sm:$0xf]
        %v567 = vld [vmem:[%s434 + $0x54] sm:$0xff]
        %v568 = vld [vmem:[%s434 + $0x5c] sm:$0xf]
        %v569 = vld [vmem:[%s434 + $0x60] sm:$0xff]
        %v570 = vld [vmem:[%s434 + $0x68] sm:$0xf]
        %v571 = vld [vmem:[%s434 + $0x6c] sm:$0xff]
        %v572 = vld [vmem:[%s434 + $0x74] sm:$0xf]
        %v573 = vld [vmem:[%s434 + $0x78] sm:$0xff]
        %v574 = vld [vmem:[%s434 + $0x80] sm:$0xf]
        %v575 = vld [vmem:[%s434 + $0x84] sm:$0xff]
        %v576 = vld [vmem:[%s434 + $0x8c] sm:$0xf]
        %v577 = vld [vmem:[%s434 + $0x90] sm:$0xff]
        %v578 = vld [vmem:[%s434 + $0x98] sm:$0xf]
        %v579 = vld [vmem:[%s434 + $0x9c] sm:$0xff]
        %v580 = vld [vmem:[%s434 + $0xa4] sm:$0xf]
        %v581 = vld [vmem:[%s434 + $0xa8] sm:$0xff]
        %v582 = vld [vmem:[%s434 + $0xb0] sm:$0xf]
        %v583 = vld [vmem:[%s434 + $0xb4] sm:$0xff]
        %v584 = vld [vmem:[%s434 + $0xbc] sm:$0xf]
        %v585 = vld [vmem:[%s529] sm:$0x7]
        %v587 = vlaneseq
        %v588 = vshrl.u32 %v587, 7
        %v589 = vsub.s32 0, %v588
        %v590 = vrot.slane %v585, %v589
        %v591 = vlaneseq
        %v592 = vshrl.u32 %v591, 7
        %v593 = vsub.s32 1, %v592
        %v594 = vrot.slane %v585, %v593
        %v595 = vlaneseq
        %v596 = vshrl.u32 %v595, 7
        %v597 = vsub.s32 2, %v596
        %v598 = vrot.slane %v585, %v597
        %v634 = vunpack.c.l.b16 %v553
        %v635 = vunpack.c.h.b16 %v553
        %v636 = vunpack.c.l.b16 %v554
        %v637 = vunpack.c.l.b16 %v555
        %v638 = vunpack.c.h.b16 %v555
        %v639 = vunpack.c.l.b16 %v556
        %v640 = vunpack.c.l.b16 %v557
        %v641 = vunpack.c.h.b16 %v557
        %v642 = vunpack.c.l.b16 %v558
        %v643 = vunpack.c.l.b16 %v559
        %v644 = vunpack.c.h.b16 %v559
        %v645 = vunpack.c.l.b16 %v560
        %v646 = vunpack.c.l.b16 %v561
        %v647 = vunpack.c.h.b16 %v561
        %v648 = vunpack.c.l.b16 %v562
        %v649 = vunpack.c.l.b16 %v563
        %v650 = vunpack.c.h.b16 %v563
        %v651 = vunpack.c.l.b16 %v564
        %v652 = vunpack.c.l.b16 %v565
        %v653 = vunpack.c.h.b16 %v565
        %v654 = vunpack.c.l.b16 %v566
        %v655 = vunpack.c.l.b16 %v567
        %v656 = vunpack.c.h.b16 %v567
        %v657 = vunpack.c.l.b16 %v568
        %v658 = vunpack.c.l.b16 %v569
        %v659 = vunpack.c.h.b16 %v569
        %v660 = vunpack.c.l.b16 %v570
        %v661 = vunpack.c.l.b16 %v571
        %v662 = vunpack.c.h.b16 %v571
        %v663 = vunpack.c.l.b16 %v572
        %v664 = vunpack.c.l.b16 %v573
        %v665 = vunpack.c.h.b16 %v573
        %v666 = vunpack.c.l.b16 %v574
        %v667 = vunpack.c.l.b16 %v575
        %v668 = vunpack.c.h.b16 %v575
        %v669 = vunpack.c.l.b16 %v576
        %v670 = vunpack.c.l.b16 %v577
        %v671 = vunpack.c.h.b16 %v577
        %v672 = vunpack.c.l.b16 %v578
        %v673 = vunpack.c.l.b16 %v579
        %v674 = vunpack.c.h.b16 %v579
        %v675 = vunpack.c.l.b16 %v580
        %v676 = vunpack.c.l.b16 %v581
        %v677 = vunpack.c.h.b16 %v581
        %v678 = vunpack.c.l.b16 %v582
        %v679 = vunpack.c.l.b16 %v583
        %v680 = vunpack.c.h.b16 %v583
        %v681 = vunpack.c.l.b16 %v584
        %v682 = vpack.c.b16 %v637, %v634
        %v683 = vpack.c.b16 %v638, %v635
        %v684 = vpack.c.b16 %v639, %v636
        %v685 = vpack.c.b16 %v643, %v640
        %v686 = vpack.c.b16 %v644, %v641
        %v687 = vpack.c.b16 %v645, %v642
        %v688 = vpack.c.b16 %v649, %v646
        %v689 = vpack.c.b16 %v650, %v647
        %v690 = vpack.c.b16 %v651, %v648
        %v691 = vpack.c.b16 %v655, %v652
        %v692 = vpack.c.b16 %v656, %v653
        %v693 = vpack.c.b16 %v657, %v654
        %v694 = vpack.c.b16 %v661, %v658
        %v695 = vpack.c.b16 %v662, %v659
        %v696 = vpack.c.b16 %v663, %v660
        %v697 = vpack.c.b16 %v667, %v664
        %v698 = vpack.c.b16 %v668, %v665
        %v699 = vpack.c.b16 %v669, %v666
        %v700 = vpack.c.b16 %v673, %v670
        %v701 = vpack.c.b16 %v674, %v671
        %v702 = vpack.c.b16 %v675, %v672
        %v703 = vpack.c.b16 %v679, %v676
        %v704 = vpack.c.b16 %v680, %v677
        %v705 = vpack.c.b16 %v681, %v678
        %730 = vmatprep.subr.bf16.mxu0 %v683
        %731 = vmatpush1.bf16.msra.mxu0 %v682
        %732 = vmatprep.subr.bf16.mxu0 %v686
        %733 = vmatpush1.bf16.msra.mxu0 %v685
        %734 = vmatprep.subr.bf16.mxu0 %v689
        %735 = vmatpush1.bf16.msra.mxu0 %v688
        %736 = vmatprep.subr.bf16.mxu0 %v692
        %737 = vmatpush1.bf16.msra.mxu0 %v691
        %738 = vmatprep.subr.bf16.mxu0 %v695
        %739 = vmatpush1.bf16.msra.mxu0 %v694
        %740 = vmatprep.subr.bf16.mxu0 %v698
        %741 = vmatpush1.bf16.msra.mxu0 %v697
        %742 = vmatprep.subr.bf16.mxu0 %v701
        %743 = vmatpush1.bf16.msra.mxu0 %v700
        %744 = vmatprep.subr.bf16.mxu0 %v704
        %745 = vmatpush1.bf16.msra.mxu0 %v703
        %746 = vmatprep.subr.bf16.mxu0 0
        %747 = vmatpush1.bf16.msra.mxu0 0
        %748 = vmatprep.subr.bf16.mxu0 0
        %749 = vmatpush1.bf16.msra.mxu0 0
        %750 = vmatprep.subr.bf16.mxu0 0
        %751 = vmatpush1.bf16.msra.mxu0 0
        %752 = vmatprep.subr.bf16.mxu0 0
        %753 = vmatpush1.bf16.msra.mxu0 0
        %754 = vmatprep.subr.bf16.mxu0 0
        %755 = vmatpush1.bf16.msra.mxu0 0
        %756 = vmatprep.subr.bf16.mxu0 0
        %757 = vmatpush1.bf16.msra.mxu0 0
        %758 = vmatprep.subr.bf16.mxu0 0
        %759 = vmatpush1.bf16.msra.mxu0 0
        %760 = vmatprep.subr.bf16.mxu0 0
        %761 = vmatpush1.bf16.msra.mxu0 0
        %762 = vmatprep.mubr.bf16.mxu0 0
        %763 = vmatmul.mubr.bf16.gmra.mrb[0].mxu0 %v552
        %v764 = vpop.f32.mrb[0].mxu0
        %v765 = vadd.f32 %v590, %v764
        %v766 = vpop.f32.mrb[0].mxu0
        %v767 = vadd.f32 %v594, %v766
        %v768 = vpop.f32.mrb[0].mxu0
        %v769 = vpop.f32.mrb[0].mxu0
        %770 = vdwg.mxu0
        %771 = vmatprep.subr.bf16.mxu0 0
        %772 = vmatpush1.bf16.msra.mxu0 %v684
        %773 = vmatprep.subr.bf16.mxu0 0
        %774 = vmatpush1.bf16.msra.mxu0 %v687
        %775 = vmatprep.subr.bf16.mxu0 0
        %776 = vmatpush1.bf16.msra.mxu0 %v690
        %777 = vmatprep.subr.bf16.mxu0 0
        %778 = vmatpush1.bf16.msra.mxu0 %v693
        %779 = vmatprep.subr.bf16.mxu0 0
        %780 = vmatpush1.bf16.msra.mxu0 %v696
        %781 = vmatprep.subr.bf16.mxu0 0
        %782 = vmatpush1.bf16.msra.mxu0 %v699
        %783 = vmatprep.subr.bf16.mxu0 0
        %784 = vmatpush1.bf16.msra.mxu0 %v702
        %785 = vmatprep.subr.bf16.mxu0 0
        %786 = vmatpush1.bf16.msra.mxu0 %v705
        %787 = vmatprep.subr.bf16.mxu0 0
        %788 = vmatpush1.bf16.msra.mxu0 0
        %789 = vmatprep.subr.bf16.mxu0 0
        %790 = vmatpush1.bf16.msra.mxu0 0
        %791 = vmatprep.subr.bf16.mxu0 0
        %792 = vmatpush1.bf16.msra.mxu0 0
        %793 = vmatprep.subr.bf16.mxu0 0
        %794 = vmatpush1.bf16.msra.mxu0 0
        %795 = vmatprep.subr.bf16.mxu0 0
        %796 = vmatpush1.bf16.msra.mxu0 0
        %797 = vmatprep.subr.bf16.mxu0 0
        %798 = vmatpush1.bf16.msra.mxu0 0
        %799 = vmatprep.subr.bf16.mxu0 0
        %800 = vmatpush1.bf16.msra.mxu0 0
        %801 = vmatprep.subr.bf16.mxu0 0
        %802 = vmatpush1.bf16.msra.mxu0 0
        %803 = vmatprep.mubr.bf16.mxu0 0
        %804 = vmatmul.mubr.bf16.gmra.mrb[0].mxu0 %v552
        %v805 = vpop.f32.mrb[0].mxu0
        %v806 = vadd.f32 %v598, %v805
        %v807 = vpop.f32.mrb[0].mxu0
        %v808 = vpop.f32.mrb[0].mxu0
        %v809 = vpop.f32.mrb[0].mxu0
        %810 = vdwg.mxu0
        %v811 = vlaneseq
        %v812 = vshrl.u32 %v811, 7
        %v813 = vlaneseq
        %v814 = vand.u32 %v813, 127
        %vm815 = vcmp.ge.s32.totalorder %v812, %v814
        %v816 = vld [vmem:[%s443] sm:$0xf]
        %v817 = vld [vmem:[%s443 + $0x4] sm:$0xf]
        %v818 = vld [vmem:[%s443 + $0x8] sm:$0xf]
        %v819 = vld [vmem:[%s443 + $0xc] sm:$0xf]
        %v820 = vld [vmem:[%s443 + $0x10] sm:$0xf]
        %v821 = vld [vmem:[%s443 + $0x14] sm:$0xf]
        %v822 = vld [vmem:[%s443 + $0x18] sm:$0xf]
        %v823 = vld [vmem:[%s443 + $0x1c] sm:$0xf]
        %v824 = vld [vmem:[%s443 + $0x20] sm:$0xf]
        %v825 = vld [vmem:[%s443 + $0x24] sm:$0xf]
        %v826 = vld [vmem:[%s443 + $0x28] sm:$0xf]
        %v827 = vld [vmem:[%s443 + $0x2c] sm:$0xf]
        %v828 = vld [vmem:[%s443 + $0x30] sm:$0xf]
        %v829 = vld [vmem:[%s443 + $0x34] sm:$0xf]
        %v830 = vld [vmem:[%s443 + $0x38] sm:$0xf]
        %v831 = vld [vmem:[%s443 + $0x3c] sm:$0xf]
        %v832 = vpack.c.bf16 %v765, %v765
        %v833 = vpack.c.bf16 %v767, %v767
        %v834 = vpack.c.bf16 %v806, %v806
        %vm835 = vcmask 261120
        %v837 = vsel %vm835, %v832, 0
        %v840 = vsel %vm835, %v833, 0
        %842 = vmatprep.subr.bf16.mxu0 0
        %843 = vmatpush1.bf16.xpose.msra.mxu0 %v840
        %844 = vmatprep.subr.bf16.mxu0 0
        %845 = vmatpush1.bf16.xpose.msra.mxu0 0
        %846 = vmatprep.subr.bf16.mxu0 0
        %847 = vmatpush1.bf16.xpose.msra.mxu0 0
        %848 = vmatprep.subr.bf16.mxu0 0
        %849 = vmatpush1.bf16.xpose.msra.mxu0 0
        %850 = vmatprep.subr.bf16.mxu0 0
        %851 = vmatpush1.bf16.xpose.msra.mxu0 0
        %852 = vmatprep.subr.bf16.mxu0 0
        %853 = vmatpush1.bf16.xpose.msra.mxu0 0
        %854 = vmatprep.subr.bf16.mxu0 0
        %855 = vmatpush1.bf16.xpose.msra.mxu0 0
        %856 = vmatprep.subr.bf16.mxu0 0
        %857 = vmatpush1.bf16.xpose.msra.mxu0 0
        %858 = vmatprep.subr.bf16.mxu0 0
        %859 = vmatpush1.bf16.xpose.msra.mxu0 0
        %860 = vmatprep.subr.bf16.mxu0 0
        %861 = vmatpush1.bf16.xpose.msra.mxu0 0
        %862 = vmatprep.subr.bf16.mxu0 0
        %863 = vmatpush1.bf16.xpose.msra.mxu0 0
        %864 = vmatprep.subr.bf16.mxu0 0
        %865 = vmatpush1.bf16.xpose.msra.mxu0 0
        %866 = vmatprep.subr.bf16.mxu0 0
        %867 = vmatpush1.bf16.xpose.msra.mxu0 0
        %868 = vmatprep.subr.bf16.mxu0 0
        %869 = vmatpush1.bf16.xpose.msra.mxu0 0
        %870 = vmatprep.subr.bf16.mxu0 0
        %871 = vmatpush1.bf16.xpose.msra.mxu0 0
        %872 = vmatprep.subr.bf16.mxu0 0
        %873 = vmatpush1.bf16.xpose.msra.mxu0 0
        %874 = vmatprep.mubr.bf16.mxu0 0
        %875 = vmatmul.mubr.bf16.gmra.mrb[0].mxu0 %v837
        %v876 = vpop.f32.mrb[0].mxu0
        %v877 = vadd.f32 0.0, %v876
        %v878 = vpop.f32.mrb[0].mxu0
        %v879 = vpop.f32.mrb[0].mxu0
        %v880 = vpop.f32.mrb[0].mxu0
        %881 = vdwg.mxu0
        %v882 = vsel %vm815, %v877, -1e+09
        %vm883 = vcmask 64512
        %v884 = vsel %vm883, %v882, -inf
        %885 = vmax.xlane.f32.xlu0 %v884
        %v886 = vpop.xlane.xlu0 %885
        %v887 = vsub.f32 %v882, %v886
        %v888 = vmul.f32 %v887, 1.442695
        %v889 = vpow.pop %v888
        %v890 = vsel %vm883, %v889, 0.0
        %891 = vadd.xlane.f32.xlu0 %v890
        %v892 = vpop.xlane.xlu0 %891
        %v893 = vrcp.pop %v892
        %v894 = vmul.f32 %v889, %v893
        %v895 = vpack.c.bf16 %v894, %v894
        %v897 = vsel %vm883, %v895, 0
        %vm899 = vcmask 1043456
        %v901 = vsel %vm899, %v834, 0
        %903 = vmatprep.subr.bf16.mxu0 0
        %904 = vmatpush1.bf16.msra.mxu0 %v901
        %905 = vmatprep.subr.bf16.mxu0 0
        %906 = vmatpush1.bf16.msra.mxu0 0
        %907 = vmatprep.subr.bf16.mxu0 0
        %908 = vmatpush1.bf16.msra.mxu0 0
        %909 = vmatprep.subr.bf16.mxu0 0
        %910 = vmatpush1.bf16.msra.mxu0 0
        %911 = vmatprep.subr.bf16.mxu0 0
        %912 = vmatpush1.bf16.msra.mxu0 0
        %913 = vmatprep.subr.bf16.mxu0 0
        %914 = vmatpush1.bf16.msra.mxu0 0
        %915 = vmatprep.subr.bf16.mxu0 0
        %916 = vmatpush1.bf16.msra.mxu0 0
        %917 = vmatprep.subr.bf16.mxu0 0
        %918 = vmatpush1.bf16.msra.mxu0 0
        %919 = vmatprep.subr.bf16.mxu0 0
        %920 = vmatpush1.bf16.msra.mxu0 0
        %921 = vmatprep.subr.bf16.mxu0 0
        %922 = vmatpush1.bf16.msra.mxu0 0
        %923 = vmatprep.subr.bf16.mxu0 0
        %924 = vmatpush1.bf16.msra.mxu0 0
        %925 = vmatprep.subr.bf16.mxu0 0
        %926 = vmatpush1.bf16.msra.mxu0 0
        %927 = vmatprep.subr.bf16.mxu0 0
        %928 = vmatpush1.bf16.msra.mxu0 0
        %929 = vmatprep.subr.bf16.mxu0 0
        %930 = vmatpush1.bf16.msra.mxu0 0
        %931 = vmatprep.subr.bf16.mxu0 0
        %932 = vmatpush1.bf16.msra.mxu0 0
        %933 = vmatprep.subr.bf16.mxu0 0
        %934 = vmatpush1.bf16.msra.mxu0 0
        %935 = vmatprep.mubr.bf16.mxu0 0
        %936 = vmatmul.mubr.bf16.gmra.mrb[0].mxu0 %v897
        %v937 = vpop.f32.mrb[0].mxu0
        %v938 = vadd.f32 0.0, %v937
        %v939 = vpop.f32.mrb[0].mxu0
        %v940 = vpop.f32.mrb[0].mxu0
        %v941 = vpop.f32.mrb[0].mxu0
        %942 = vdwg.mxu0
        %v943 = vpack.c.bf16 %v938, %v938
        %945 = vrot.lane.b32.xlu0 %v832, 96
        %v946 = vpop.permute.xlu0 %945
        %948 = vrot.lane.b32.xlu0 %v833, 96
        %v949 = vpop.permute.xlu0 %948
        %v951 = vsel %vm835, %v946, 0
        %v954 = vsel %vm835, %v949, 0
        %956 = vmatprep.subr.bf16.mxu0 0
        %957 = vmatpush1.bf16.xpose.msra.mxu0 %v954
        %958 = vmatprep.subr.bf16.mxu0 0
        %959 = vmatpush1.bf16.xpose.msra.mxu0 0
        %960 = vmatprep.subr.bf16.mxu0 0
        %961 = vmatpush1.bf16.xpose.msra.mxu0 0
        %962 = vmatprep.subr.bf16.mxu0 0
        %963 = vmatpush1.bf16.xpose.msra.mxu0 0
        %964 = vmatprep.subr.bf16.mxu0 0
        %965 = vmatpush1.bf16.xpose.msra.mxu0 0
        %966 = vmatprep.subr.bf16.mxu0 0
        %967 = vmatpush1.bf16.xpose.msra.mxu0 0
        %968 = vmatprep.subr.bf16.mxu0 0
        %969 = vmatpush1.bf16.xpose.msra.mxu0 0
        %970 = vmatprep.subr.bf16.mxu0 0
        %971 = vmatpush1.bf16.xpose.msra.mxu0 0
        %972 = vmatprep.subr.bf16.mxu0 0
        %973 = vmatpush1.bf16.xpose.msra.mxu0 0
        %974 = vmatprep.subr.bf16.mxu0 0
        %975 = vmatpush1.bf16.xpose.msra.mxu0 0
        %976 = vmatprep.subr.bf16.mxu0 0
        %977 = vmatpush1.bf16.xpose.msra.mxu0 0
        %978 = vmatprep.subr.bf16.mxu0 0
        %979 = vmatpush1.bf16.xpose.msra.mxu0 0
        %980 = vmatprep.subr.bf16.mxu0 0
        %981 = vmatpush1.bf16.xpose.msra.mxu0 0
        %982 = vmatprep.subr.bf16.mxu0 0
        %983 = vmatpush1.bf16.xpose.msra.mxu0 0
        %984 = vmatprep.subr.bf16.mxu0 0
        %985 = vmatpush1.bf16.xpose.msra.mxu0 0
        %986 = vmatprep.subr.bf16.mxu0 0
        %987 = vmatpush1.bf16.xpose.msra.mxu0 0
        %988 = vmatprep.mubr.bf16.mxu0 0
        %989 = vmatmul.mubr.bf16.gmra.mrb[0].mxu0 %v951
        %v990 = vpop.f32.mrb[0].mxu0
        %v991 = vadd.f32 0.0, %v990
        %v992 = vpop.f32.mrb[0].mxu0
        %v993 = vpop.f32.mrb[0].mxu0
        %v994 = vpop.f32.mrb[0].mxu0
        %995 = vdwg.mxu0
        %v996 = vsel %vm815, %v991, -1e+09
        %v997 = vsel %vm883, %v996, -inf
        %998 = vmax.xlane.f32.xlu0 %v997
        %v999 = vpop.xlane.xlu0 %998
        %v1000 = vsub.f32 %v996, %v999
        %v1001 = vmul.f32 %v1000, 1.442695
        %v1002 = vpow.pop %v1001
        %v1003 = vsel %vm883, %v1002, 0.0
        %1004 = vadd.xlane.f32.xlu0 %v1003
        %v1005 = vpop.xlane.xlu0 %1004
        %v1006 = vrcp.pop %v1005
        %v1007 = vmul.f32 %v1002, %v1006
        %v1008 = vpack.c.bf16 %v1007, %v1007
        %1010 = vrot.lane.b32.xlu0 %v834, 96
        %v1011 = vpop.permute.xlu0 %1010
        %v1013 = vsel %vm883, %v1008, 0
        %v1016 = vsel %vm899, %v1011, 0
        %1018 = vmatprep.subr.bf16.mxu0 0
        %1019 = vmatpush1.bf16.msra.mxu0 %v1016
        %1020 = vmatprep.subr.bf16.mxu0 0
        %1021 = vmatpush1.bf16.msra.mxu0 0
        %1022 = vmatprep.subr.bf16.mxu0 0
        %1023 = vmatpush1.bf16.msra.mxu0 0
        %1024 = vmatprep.subr.bf16.mxu0 0
        %1025 = vmatpush1.bf16.msra.mxu0 0
        %1026 = vmatprep.subr.bf16.mxu0 0
        %1027 = vmatpush1.bf16.msra.mxu0 0
        %1028 = vmatprep.subr.bf16.mxu0 0
        %1029 = vmatpush1.bf16.msra.mxu0 0
        %1030 = vmatprep.subr.bf16.mxu0 0
        %1031 = vmatpush1.bf16.msra.mxu0 0
        %1032 = vmatprep.subr.bf16.mxu0 0
        %1033 = vmatpush1.bf16.msra.mxu0 0
        %1034 = vmatprep.subr.bf16.mxu0 0
        %1035 = vmatpush1.bf16.msra.mxu0 0
        %1036 = vmatprep.subr.bf16.mxu0 0
        %1037 = vmatpush1.bf16.msra.mxu0 0
        %1038 = vmatprep.subr.bf16.mxu0 0
        %1039 = vmatpush1.bf16.msra.mxu0 0
        %1040 = vmatprep.subr.bf16.mxu0 0
        %1041 = vmatpush1.bf16.msra.mxu0 0
        %1042 = vmatprep.subr.bf16.mxu0 0
        %1043 = vmatpush1.bf16.msra.mxu0 0
        %1044 = vmatprep.subr.bf16.mxu0 0
        %1045 = vmatpush1.bf16.msra.mxu0 0
        %1046 = vmatprep.subr.bf16.mxu0 0
        %1047 = vmatpush1.bf16.msra.mxu0 0
        %1048 = vmatprep.subr.bf16.mxu0 0
        %1049 = vmatpush1.bf16.msra.mxu0 0
        %1050 = vmatprep.mubr.bf16.mxu0 0
        %1051 = vmatmul.mubr.bf16.gmra.mrb[0].mxu0 %v1013
        %v1052 = vpop.f32.mrb[0].mxu0
        %v1053 = vadd.f32 0.0, %v1052
        %v1054 = vpop.f32.mrb[0].mxu0
        %v1055 = vpop.f32.mrb[0].mxu0
        %v1056 = vpop.f32.mrb[0].mxu0
        %1057 = vdwg.mxu0
        %v1058 = vpack.c.bf16 %v1053, %v1053
        %v1063 = vunpack.c.l.b16 %v820
        %v1064 = vunpack.c.l.b16 %v821
        %v1065 = vunpack.c.l.b16 %v822
        %v1066 = vunpack.c.l.b16 %v823
        %v1067 = vpack.c.b16 %v1064, %v1063
        %v1068 = vpack.c.b16 %v1066, %v1065
        %v1072 = vsel %vm835, %v1058, 0
        %1074 = vmatprep.subr.bf16.mxu0 0
        %1075 = vmatpush1.bf16.msra.mxu0 %v1067
        %1076 = vmatprep.subr.bf16.mxu0 0
        %1077 = vmatpush1.bf16.msra.mxu0 %v1068
        %1078 = vmatprep.subr.bf16.mxu0 0
        %1079 = vmatpush1.bf16.msra.mxu0 0
        %1080 = vmatprep.subr.bf16.mxu0 0
        %1081 = vmatpush1.bf16.msra.mxu0 0
        %1082 = vmatprep.subr.bf16.mxu0 0
        %1083 = vmatpush1.bf16.msra.mxu0 0
        %1084 = vmatprep.subr.bf16.mxu0 0
        %1085 = vmatpush1.bf16.msra.mxu0 0
        %1086 = vmatprep.subr.bf16.mxu0 0
        %1087 = vmatpush1.bf16.msra.mxu0 0
        %1088 = vmatprep.subr.bf16.mxu0 0
        %1089 = vmatpush1.bf16.msra.mxu0 0
        %1090 = vmatprep.subr.bf16.mxu0 0
        %1091 = vmatpush1.bf16.msra.mxu0 0
        %1092 = vmatprep.subr.bf16.mxu0 0
        %1093 = vmatpush1.bf16.msra.mxu0 0
        %1094 = vmatprep.subr.bf16.mxu0 0
        %1095 = vmatpush1.bf16.msra.mxu0 0
        %1096 = vmatprep.subr.bf16.mxu0 0
        %1097 = vmatpush1.bf16.msra.mxu0 0
        %1098 = vmatprep.subr.bf16.mxu0 0
        %1099 = vmatpush1.bf16.msra.mxu0 0
        %1100 = vmatprep.subr.bf16.mxu0 0
        %1101 = vmatpush1.bf16.msra.mxu0 0
        %1102 = vmatprep.subr.bf16.mxu0 0
        %1103 = vmatpush1.bf16.msra.mxu0 0
        %1104 = vmatprep.subr.bf16.mxu0 0
        %1105 = vmatpush1.bf16.msra.mxu0 0
        %1106 = vmatprep.mubr.bf16.mxu0 0
        %1107 = vmatmul.mubr.bf16.gmra.mrb[0].mxu0 %v1072
        %v1108 = vpop.f32.mrb[0].mxu0
        %v1109 = vadd.f32 0.0, %v1108
        %v1110 = vpop.f32.mrb[0].mxu0
        %v1111 = vpop.f32.mrb[0].mxu0
        %v1112 = vpop.f32.mrb[0].mxu0
        %1113 = vdwg.mxu0
        %v1118 = vunpack.c.l.b16 %v816
        %v1119 = vunpack.c.l.b16 %v817
        %v1120 = vunpack.c.l.b16 %v818
        %v1121 = vunpack.c.l.b16 %v819
        %v1122 = vpack.c.b16 %v1119, %v1118
        %v1123 = vpack.c.b16 %v1121, %v1120
        %v1127 = vsel %vm835, %v943, 0
        %1129 = vmatprep.subr.bf16.mxu0 0
        %1130 = vmatpush1.bf16.msra.mxu0 %v1122
        %1131 = vmatprep.subr.bf16.mxu0 0
        %1132 = vmatpush1.bf16.msra.mxu0 %v1123
        %1133 = vmatprep.subr.bf16.mxu0 0
        %1134 = vmatpush1.bf16.msra.mxu0 0
        %1135 = vmatprep.subr.bf16.mxu0 0
        %1136 = vmatpush1.bf16.msra.mxu0 0
        %1137 = vmatprep.subr.bf16.mxu0 0
        %1138 = vmatpush1.bf16.msra.mxu0 0
        %1139 = vmatprep.subr.bf16.mxu0 0
        %1140 = vmatpush1.bf16.msra.mxu0 0
        %1141 = vmatprep.subr.bf16.mxu0 0
        %1142 = vmatpush1.bf16.msra.mxu0 0
        %1143 = vmatprep.subr.bf16.mxu0 0
        %1144 = vmatpush1.bf16.msra.mxu0 0
        %1145 = vmatprep.subr.bf16.mxu0 0
        %1146 = vmatpush1.bf16.msra.mxu0 0
        %1147 = vmatprep.subr.bf16.mxu0 0
        %1148 = vmatpush1.bf16.msra.mxu0 0
        %1149 = vmatprep.subr.bf16.mxu0 0
        %1150 = vmatpush1.bf16.msra.mxu0 0
        %1151 = vmatprep.subr.bf16.mxu0 0
        %1152 = vmatpush1.bf16.msra.mxu0 0
        %1153 = vmatprep.subr.bf16.mxu0 0
        %1154 = vmatpush1.bf16.msra.mxu0 0
        %1155 = vmatprep.subr.bf16.mxu0 0
        %1156 = vmatpush1.bf16.msra.mxu0 0
        %1157 = vmatprep.subr.bf16.mxu0 0
        %1158 = vmatpush1.bf16.msra.mxu0 0
        %1159 = vmatprep.subr.bf16.mxu0 0
        %1160 = vmatpush1.bf16.msra.mxu0 0
        %1161 = vmatprep.mubr.bf16.mxu0 0
        %1162 = vmatmul.mubr.bf16.gmra.mrb[0].mxu0 %v1127
        %v1163 = vpop.f32.mrb[0].mxu0
        %v1164 = vadd.f32 %v1109, %v1163
        %v1165 = vpop.f32.mrb[0].mxu0
        %v1166 = vpop.f32.mrb[0].mxu0
        %v1167 = vpop.f32.mrb[0].mxu0
        %1168 = vdwg.mxu0
        %1169 = vrot.lane.b32.xlu0 %v832, 64
        %v1170 = vpop.permute.xlu0 %1169
        %1171 = vrot.lane.b32.xlu0 %v833, 64
        %v1172 = vpop.permute.xlu0 %1171
        %v1174 = vsel %vm835, %v1170, 0
        %v1177 = vsel %vm835, %v1172, 0
        %1179 = vmatprep.subr.bf16.mxu0 0
        %1180 = vmatpush1.bf16.xpose.msra.mxu0 %v1177
        %1181 = vmatprep.subr.bf16.mxu0 0
        %1182 = vmatpush1.bf16.xpose.msra.mxu0 0
        %1183 = vmatprep.subr.bf16.mxu0 0
        %1184 = vmatpush1.bf16.xpose.msra.mxu0 0
        %1185 = vmatprep.subr.bf16.mxu0 0
        %1186 = vmatpush1.bf16.xpose.msra.mxu0 0
        %1187 = vmatprep.subr.bf16.mxu0 0
        %1188 = vmatpush1.bf16.xpose.msra.mxu0 0
        %1189 = vmatprep.subr.bf16.mxu0 0
        %1190 = vmatpush1.bf16.xpose.msra.mxu0 0
        %1191 = vmatprep.subr.bf16.mxu0 0
        %1192 = vmatpush1.bf16.xpose.msra.mxu0 0
        %1193 = vmatprep.subr.bf16.mxu0 0
        %1194 = vmatpush1.bf16.xpose.msra.mxu0 0
        %1195 = vmatprep.subr.bf16.mxu0 0
        %1196 = vmatpush1.bf16.xpose.msra.mxu0 0
        %1197 = vmatprep.subr.bf16.mxu0 0
        %1198 = vmatpush1.bf16.xpose.msra.mxu0 0
        %1199 = vmatprep.subr.bf16.mxu0 0
        %1200 = vmatpush1.bf16.xpose.msra.mxu0 0
        %1201 = vmatprep.subr.bf16.mxu0 0
        %1202 = vmatpush1.bf16.xpose.msra.mxu0 0
        %1203 = vmatprep.subr.bf16.mxu0 0
        %1204 = vmatpush1.bf16.xpose.msra.mxu0 0
        %1205 = vmatprep.subr.bf16.mxu0 0
        %1206 = vmatpush1.bf16.xpose.msra.mxu0 0
        %1207 = vmatprep.subr.bf16.mxu0 0
        %1208 = vmatpush1.bf16.xpose.msra.mxu0 0
        %1209 = vmatprep.subr.bf16.mxu0 0
        %1210 = vmatpush1.bf16.xpose.msra.mxu0 0
        %1211 = vmatprep.mubr.bf16.mxu0 0
        %1212 = vmatmul.mubr.bf16.gmra.mrb[0].mxu0 %v1174
        %v1213 = vpop.f32.mrb[0].mxu0
        %v1214 = vadd.f32 0.0, %v1213
        %v1215 = vpop.f32.mrb[0].mxu0
        %v1216 = vpop.f32.mrb[0].mxu0
        %v1217 = vpop.f32.mrb[0].mxu0
        %1218 = vdwg.mxu0
        %v1219 = vsel %vm815, %v1214, -1e+09
        %v1220 = vsel %vm883, %v1219, -inf
        %1221 = vmax.xlane.f32.xlu0 %v1220
        %v1222 = vpop.xlane.xlu0 %1221
        %v1223 = vsub.f32 %v1219, %v1222
        %v1224 = vmul.f32 %v1223, 1.442695
        %v1225 = vpow.pop %v1224
        %v1226 = vsel %vm883, %v1225, 0.0
        %1227 = vadd.xlane.f32.xlu0 %v1226
        %v1228 = vpop.xlane.xlu0 %1227
        %v1229 = vrcp.pop %v1228
        %v1230 = vmul.f32 %v1225, %v1229
        %v1231 = vpack.c.bf16 %v1230, %v1230
        %1232 = vrot.lane.b32.xlu0 %v834, 64
        %v1233 = vpop.permute.xlu0 %1232
        %v1235 = vsel %vm883, %v1231, 0
        %v1238 = vsel %vm899, %v1233, 0
        %1240 = vmatprep.subr.bf16.mxu0 0
        %1241 = vmatpush1.bf16.msra.mxu0 %v1238
        %1242 = vmatprep.subr.bf16.mxu0 0
        %1243 = vmatpush1.bf16.msra.mxu0 0
        %1244 = vmatprep.subr.bf16.mxu0 0
        %1245 = vmatpush1.bf16.msra.mxu0 0
        %1246 = vmatprep.subr.bf16.mxu0 0
        %1247 = vmatpush1.bf16.msra.mxu0 0
        %1248 = vmatprep.subr.bf16.mxu0 0
        %1249 = vmatpush1.bf16.msra.mxu0 0
        %1250 = vmatprep.subr.bf16.mxu0 0
        %1251 = vmatpush1.bf16.msra.mxu0 0
        %1252 = vmatprep.subr.bf16.mxu0 0
        %1253 = vmatpush1.bf16.msra.mxu0 0
        %1254 = vmatprep.subr.bf16.mxu0 0
        %1255 = vmatpush1.bf16.msra.mxu0 0
        %1256 = vmatprep.subr.bf16.mxu0 0
        %1257 = vmatpush1.bf16.msra.mxu0 0
        %1258 = vmatprep.subr.bf16.mxu0 0
        %1259 = vmatpush1.bf16.msra.mxu0 0
        %1260 = vmatprep.subr.bf16.mxu0 0
        %1261 = vmatpush1.bf16.msra.mxu0 0
        %1262 = vmatprep.subr.bf16.mxu0 0
        %1263 = vmatpush1.bf16.msra.mxu0 0
        %1264 = vmatprep.subr.bf16.mxu0 0
        %1265 = vmatpush1.bf16.msra.mxu0 0
        %1266 = vmatprep.subr.bf16.mxu0 0
        %1267 = vmatpush1.bf16.msra.mxu0 0
        %1268 = vmatprep.subr.bf16.mxu0 0
        %1269 = vmatpush1.bf16.msra.mxu0 0
        %1270 = vmatprep.subr.bf16.mxu0 0
        %1271 = vmatpush1.bf16.msra.mxu0 0
        %1272 = vmatprep.mubr.bf16.mxu0 0
        %1273 = vmatmul.mubr.bf16.gmra.mrb[0].mxu0 %v1235
        %v1274 = vpop.f32.mrb[0].mxu0
        %v1275 = vadd.f32 0.0, %v1274
        %v1276 = vpop.f32.mrb[0].mxu0
        %v1277 = vpop.f32.mrb[0].mxu0
        %v1278 = vpop.f32.mrb[0].mxu0
        %1279 = vdwg.mxu0
        %v1280 = vpack.c.bf16 %v1275, %v1275
        %v1285 = vunpack.c.l.b16 %v824
        %v1286 = vunpack.c.l.b16 %v825
        %v1287 = vunpack.c.l.b16 %v826
        %v1288 = vunpack.c.l.b16 %v827
        %v1289 = vpack.c.b16 %v1286, %v1285
        %v1290 = vpack.c.b16 %v1288, %v1287
        %v1294 = vsel %vm835, %v1280, 0
        %1296 = vmatprep.subr.bf16.mxu0 0
        %1297 = vmatpush1.bf16.msra.mxu0 %v1289
        %1298 = vmatprep.subr.bf16.mxu0 0
        %1299 = vmatpush1.bf16.msra.mxu0 %v1290
        %1300 = vmatprep.subr.bf16.mxu0 0
        %1301 = vmatpush1.bf16.msra.mxu0 0
        %1302 = vmatprep.subr.bf16.mxu0 0
        %1303 = vmatpush1.bf16.msra.mxu0 0
        %1304 = vmatprep.subr.bf16.mxu0 0
        %1305 = vmatpush1.bf16.msra.mxu0 0
        %1306 = vmatprep.subr.bf16.mxu0 0
        %1307 = vmatpush1.bf16.msra.mxu0 0
        %1308 = vmatprep.subr.bf16.mxu0 0
        %1309 = vmatpush1.bf16.msra.mxu0 0
        %1310 = vmatprep.subr.bf16.mxu0 0
        %1311 = vmatpush1.bf16.msra.mxu0 0
        %1312 = vmatprep.subr.bf16.mxu0 0
        %1313 = vmatpush1.bf16.msra.mxu0 0
        %1314 = vmatprep.subr.bf16.mxu0 0
        %1315 = vmatpush1.bf16.msra.mxu0 0
        %1316 = vmatprep.subr.bf16.mxu0 0
        %1317 = vmatpush1.bf16.msra.mxu0 0
        %1318 = vmatprep.subr.bf16.mxu0 0
        %1319 = vmatpush1.bf16.msra.mxu0 0
        %1320 = vmatprep.subr.bf16.mxu0 0
        %1321 = vmatpush1.bf16.msra.mxu0 0
        %1322 = vmatprep.subr.bf16.mxu0 0
        %1323 = vmatpush1.bf16.msra.mxu0 0
        %1324 = vmatprep.subr.bf16.mxu0 0
        %1325 = vmatpush1.bf16.msra.mxu0 0
        %1326 = vmatprep.subr.bf16.mxu0 0
        %1327 = vmatpush1.bf16.msra.mxu0 0
        %1328 = vmatprep.mubr.bf16.mxu0 0
        %1329 = vmatmul.mubr.bf16.gmra.mrb[0].mxu0 %v1294
        %v1330 = vpop.f32.mrb[0].mxu0
        %v1331 = vadd.f32 0.0, %v1330
        %v1332 = vpop.f32.mrb[0].mxu0
        %v1333 = vpop.f32.mrb[0].mxu0
        %v1334 = vpop.f32.mrb[0].mxu0
        %1335 = vdwg.mxu0
        %v1336 = vadd.f32 %v1164, %v1331
        %1337 = vrot.lane.b32.xlu0 %v832, 32
        %v1338 = vpop.permute.xlu0 %1337
        %1339 = vrot.lane.b32.xlu0 %v833, 32
        %v1340 = vpop.permute.xlu0 %1339
        %v1342 = vsel %vm835, %v1338, 0
        %v1345 = vsel %vm835, %v1340, 0
        %1347 = vmatprep.subr.bf16.mxu0 0
        %1348 = vmatpush1.bf16.xpose.msra.mxu0 %v1345
        %1349 = vmatprep.subr.bf16.mxu0 0
        %1350 = vmatpush1.bf16.xpose.msra.mxu0 0
        %1351 = vmatprep.subr.bf16.mxu0 0
        %1352 = vmatpush1.bf16.xpose.msra.mxu0 0
        %1353 = vmatprep.subr.bf16.mxu0 0
        %1354 = vmatpush1.bf16.xpose.msra.mxu0 0
        %1355 = vmatprep.subr.bf16.mxu0 0
        %1356 = vmatpush1.bf16.xpose.msra.mxu0 0
        %1357 = vmatprep.subr.bf16.mxu0 0
        %1358 = vmatpush1.bf16.xpose.msra.mxu0 0
        %1359 = vmatprep.subr.bf16.mxu0 0
        %1360 = vmatpush1.bf16.xpose.msra.mxu0 0
        %1361 = vmatprep.subr.bf16.mxu0 0
        %1362 = vmatpush1.bf16.xpose.msra.mxu0 0
        %1363 = vmatprep.subr.bf16.mxu0 0
        %1364 = vmatpush1.bf16.xpose.msra.mxu0 0
        %1365 = vmatprep.subr.bf16.mxu0 0
        %1366 = vmatpush1.bf16.xpose.msra.mxu0 0
        %1367 = vmatprep.subr.bf16.mxu0 0
        %1368 = vmatpush1.bf16.xpose.msra.mxu0 0
        %1369 = vmatprep.subr.bf16.mxu0 0
        %1370 = vmatpush1.bf16.xpose.msra.mxu0 0
        %1371 = vmatprep.subr.bf16.mxu0 0
        %1372 = vmatpush1.bf16.xpose.msra.mxu0 0
        %1373 = vmatprep.subr.bf16.mxu0 0
        %1374 = vmatpush1.bf16.xpose.msra.mxu0 0
        %1375 = vmatprep.subr.bf16.mxu0 0
        %1376 = vmatpush1.bf16.xpose.msra.mxu0 0
        %1377 = vmatprep.subr.bf16.mxu0 0
        %1378 = vmatpush1.bf16.xpose.msra.mxu0 0
        %1379 = vmatprep.mubr.bf16.mxu0 0
        %1380 = vmatmul.mubr.bf16.gmra.mrb[0].mxu0 %v1342
        %v1381 = vpop.f32.mrb[0].mxu0
        %v1382 = vadd.f32 0.0, %v1381
        %v1383 = vpop.f32.mrb[0].mxu0
        %v1384 = vpop.f32.mrb[0].mxu0
        %v1385 = vpop.f32.mrb[0].mxu0
        %1386 = vdwg.mxu0
        %v1387 = vsel %vm815, %v1382, -1e+09
        %v1388 = vsel %vm883, %v1387, -inf
        %1389 = vmax.xlane.f32.xlu0 %v1388
        %v1390 = vpop.xlane.xlu0 %1389
        %v1391 = vsub.f32 %v1387, %v1390
        %v1392 = vmul.f32 %v1391, 1.442695
        %v1393 = vpow.pop %v1392
        %v1394 = vsel %vm883, %v1393, 0.0
        %1395 = vadd.xlane.f32.xlu0 %v1394
        %v1396 = vpop.xlane.xlu0 %1395
        %v1397 = vrcp.pop %v1396
        %v1398 = vmul.f32 %v1393, %v1397
        %v1399 = vpack.c.bf16 %v1398, %v1398
        %1400 = vrot.lane.b32.xlu0 %v834, 32
        %v1401 = vpop.permute.xlu0 %1400
        %v1403 = vsel %vm883, %v1399, 0
        %v1406 = vsel %vm899, %v1401, 0
        %1408 = vmatprep.subr.bf16.mxu0 0
        %1409 = vmatpush1.bf16.msra.mxu0 %v1406
        %1410 = vmatprep.subr.bf16.mxu0 0
        %1411 = vmatpush1.bf16.msra.mxu0 0
        %1412 = vmatprep.subr.bf16.mxu0 0
        %1413 = vmatpush1.bf16.msra.mxu0 0
        %1414 = vmatprep.subr.bf16.mxu0 0
        %1415 = vmatpush1.bf16.msra.mxu0 0
        %1416 = vmatprep.subr.bf16.mxu0 0
        %1417 = vmatpush1.bf16.msra.mxu0 0
        %1418 = vmatprep.subr.bf16.mxu0 0
        %1419 = vmatpush1.bf16.msra.mxu0 0
        %1420 = vmatprep.subr.bf16.mxu0 0
        %1421 = vmatpush1.bf16.msra.mxu0 0
        %1422 = vmatprep.subr.bf16.mxu0 0
        %1423 = vmatpush1.bf16.msra.mxu0 0
        %1424 = vmatprep.subr.bf16.mxu0 0
        %1425 = vmatpush1.bf16.msra.mxu0 0
        %1426 = vmatprep.subr.bf16.mxu0 0
        %1427 = vmatpush1.bf16.msra.mxu0 0
        %1428 = vmatprep.subr.bf16.mxu0 0
        %1429 = vmatpush1.bf16.msra.mxu0 0
        %1430 = vmatprep.subr.bf16.mxu0 0
        %1431 = vmatpush1.bf16.msra.mxu0 0
        %1432 = vmatprep.subr.bf16.mxu0 0
        %1433 = vmatpush1.bf16.msra.mxu0 0
        %1434 = vmatprep.subr.bf16.mxu0 0
        %1435 = vmatpush1.bf16.msra.mxu0 0
        %1436 = vmatprep.subr.bf16.mxu0 0
        %1437 = vmatpush1.bf16.msra.mxu0 0
        %1438 = vmatprep.subr.bf16.mxu0 0
        %1439 = vmatpush1.bf16.msra.mxu0 0
        %1440 = vmatprep.mubr.bf16.mxu0 0
        %1441 = vmatmul.mubr.bf16.gmra.mrb[0].mxu0 %v1403
        %v1442 = vpop.f32.mrb[0].mxu0
        %v1443 = vadd.f32 0.0, %v1442
        %v1444 = vpop.f32.mrb[0].mxu0
        %v1445 = vpop.f32.mrb[0].mxu0
        %v1446 = vpop.f32.mrb[0].mxu0
        %1447 = vdwg.mxu0
        %v1448 = vpack.c.bf16 %v1443, %v1443
        %v1453 = vunpack.c.l.b16 %v828
        %v1454 = vunpack.c.l.b16 %v829
        %v1455 = vunpack.c.l.b16 %v830
        %v1456 = vunpack.c.l.b16 %v831
        %v1457 = vpack.c.b16 %v1454, %v1453
        %v1458 = vpack.c.b16 %v1456, %v1455
        %v1462 = vsel %vm835, %v1448, 0
        %1464 = vmatprep.subr.bf16.mxu0 0
        %1465 = vmatpush1.bf16.msra.mxu0 %v1457
        %1466 = vmatprep.subr.bf16.mxu0 0
        %1467 = vmatpush1.bf16.msra.mxu0 %v1458
        %1468 = vmatprep.subr.bf16.mxu0 0
        %1469 = vmatpush1.bf16.msra.mxu0 0
        %1470 = vmatprep.subr.bf16.mxu0 0
        %1471 = vmatpush1.bf16.msra.mxu0 0
        %1472 = vmatprep.subr.bf16.mxu0 0
        %1473 = vmatpush1.bf16.msra.mxu0 0
        %1474 = vmatprep.subr.bf16.mxu0 0
        %1475 = vmatpush1.bf16.msra.mxu0 0
        %1476 = vmatprep.subr.bf16.mxu0 0
        %1477 = vmatpush1.bf16.msra.mxu0 0
        %1478 = vmatprep.subr.bf16.mxu0 0
        %1479 = vmatpush1.bf16.msra.mxu0 0
        %1480 = vmatprep.subr.bf16.mxu0 0
        %1481 = vmatpush1.bf16.msra.mxu0 0
        %1482 = vmatprep.subr.bf16.mxu0 0
        %1483 = vmatpush1.bf16.msra.mxu0 0
        %1484 = vmatprep.subr.bf16.mxu0 0
        %1485 = vmatpush1.bf16.msra.mxu0 0
        %1486 = vmatprep.subr.bf16.mxu0 0
        %1487 = vmatpush1.bf16.msra.mxu0 0
        %1488 = vmatprep.subr.bf16.mxu0 0
        %1489 = vmatpush1.bf16.msra.mxu0 0
        %1490 = vmatprep.subr.bf16.mxu0 0
        %1491 = vmatpush1.bf16.msra.mxu0 0
        %1492 = vmatprep.subr.bf16.mxu0 0
        %1493 = vmatpush1.bf16.msra.mxu0 0
        %1494 = vmatprep.subr.bf16.mxu0 0
        %1495 = vmatpush1.bf16.msra.mxu0 0
        %1496 = vmatprep.mubr.bf16.mxu0 0
        %1497 = vmatmul.mubr.bf16.gmra.mrb[0].mxu0 %v1462
        %v1498 = vpop.f32.mrb[0].mxu0
        %v1499 = vadd.f32 0.0, %v1498
        %v1500 = vpop.f32.mrb[0].mxu0
        %v1501 = vpop.f32.mrb[0].mxu0
        %v1502 = vpop.f32.mrb[0].mxu0
        %1503 = vdwg.mxu0
        %v1504 = vadd.f32 %v1336, %v1499
        %v1505 = vlaneseq
        %v1506 = vshrl.u32 %v1505, 7
        %v1507 = vsub.s32 0, %v1506
        %v1508 = vrot.slane %v546, %v1507
        %v1509 = vadd.f32 %v1504, %v1508
        %v1510 = vadd.f32 %v545, %v1509
        %1511 = vadd.xlane.f32.xlu0 %v1510
        %v1512 = vpop.xlane.xlu0 %1511
        %v1513 = vrcp.pop 128.0
        %v1514 = vmul.f32 %v1512, %v1513
        %v1515 = vsub.f32 %v1510, %v1514
        %v1516 = vmul.f32 %v1515, %v1515
        %1517 = vadd.xlane.f32.xlu0 %v1516
        %v1518 = vpop.xlane.xlu0 %1517
        %v1519 = vmul.f32 %v1518, %v1513
        %v1520 = vadd.f32 %v1519, 1e-05
        %v1521 = vrsqrt.pop %v1520
        %v1522 = vmul.f32 %v1515, %v1521
        %v1523 = vlaneseq
        %v1524 = vshrl.u32 %v1523, 7
        %v1525 = vsub.s32 0, %v1524
        %v1526 = vrot.slane %v547, %v1525
        %v1527 = vmul.f32 %v1522, %v1526
        %v1528 = vlaneseq
        %v1529 = vshrl.u32 %v1528, 7
        %v1530 = vsub.s32 0, %v1529
        %v1531 = vrot.slane %v548, %v1530
        %v1532 = vadd.f32 %v1527, %v1531
        %v1533 = vpack.c.bf16 %v1532, %v1532
        %v1534 = vld [vmem:[%s452] sm:$0xff]
        %v1535 = vld [vmem:[%s452 + $0x8] sm:$0xff]
        %v1536 = vld [vmem:[%s452 + $0x10] sm:$0xff]
        %v1537 = vld [vmem:[%s452 + $0x18] sm:$0xff]
        %v1538 = vld [vmem:[%s452 + $0x20] sm:$0xff]
        %v1539 = vld [vmem:[%s452 + $0x28] sm:$0xff]
        %v1540 = vld [vmem:[%s452 + $0x30] sm:$0xff]
        %v1541 = vld [vmem:[%s452 + $0x38] sm:$0xff]
        %v1542 = vld [vmem:[%s452 + $0x40] sm:$0xff]
        %v1543 = vld [vmem:[%s452 + $0x48] sm:$0xff]
        %v1544 = vld [vmem:[%s452 + $0x50] sm:$0xff]
        %v1545 = vld [vmem:[%s452 + $0x58] sm:$0xff]
        %v1546 = vld [vmem:[%s452 + $0x60] sm:$0xff]
        %v1547 = vld [vmem:[%s452 + $0x68] sm:$0xff]
        %v1548 = vld [vmem:[%s452 + $0x70] sm:$0xff]
        %v1549 = vld [vmem:[%s452 + $0x78] sm:$0xff]
        %v1550 = vld [vmem:[%s533] sm:$0x3]
        %v1552 = vlaneseq
        %v1553 = vshrl.u32 %v1552, 7
        %v1554 = vsub.s32 0, %v1553
        %v1555 = vrot.slane %v1550, %v1554
        %v1556 = vlaneseq
        %v1557 = vshrl.u32 %v1556, 7
        %v1558 = vsub.s32 1, %v1557
        %v1559 = vrot.slane %v1550, %v1558
        %v1578 = vunpack.c.l.b16 %v1534
        %v1579 = vunpack.c.h.b16 %v1534
        %v1580 = vunpack.c.l.b16 %v1535
        %v1581 = vunpack.c.h.b16 %v1535
        %v1582 = vunpack.c.l.b16 %v1536
        %v1583 = vunpack.c.h.b16 %v1536
        %v1584 = vunpack.c.l.b16 %v1537
        %v1585 = vunpack.c.h.b16 %v1537
        %v1586 = vunpack.c.l.b16 %v1538
        %v1587 = vunpack.c.h.b16 %v1538
        %v1588 = vunpack.c.l.b16 %v1539
        %v1589 = vunpack.c.h.b16 %v1539
        %v1590 = vunpack.c.l.b16 %v1540
        %v1591 = vunpack.c.h.b16 %v1540
        %v1592 = vunpack.c.l.b16 %v1541
        %v1593 = vunpack.c.h.b16 %v1541
        %v1594 = vunpack.c.l.b16 %v1542
        %v1595 = vunpack.c.h.b16 %v1542
        %v1596 = vunpack.c.l.b16 %v1543
        %v1597 = vunpack.c.h.b16 %v1543
        %v1598 = vunpack.c.l.b16 %v1544
        %v1599 = vunpack.c.h.b16 %v1544
        %v1600 = vunpack.c.l.b16 %v1545
        %v1601 = vunpack.c.h.b16 %v1545
        %v1602 = vunpack.c.l.b16 %v1546
        %v1603 = vunpack.c.h.b16 %v1546
        %v1604 = vunpack.c.l.b16 %v1547
        %v1605 = vunpack.c.h.b16 %v1547
        %v1606 = vunpack.c.l.b16 %v1548
        %v1607 = vunpack.c.h.b16 %v1548
        %v1608 = vunpack.c.l.b16 %v1549
        %v1609 = vunpack.c.h.b16 %v1549
        %v1610 = vpack.c.b16 %v1580, %v1578
        %v1611 = vpack.c.b16 %v1581, %v1579
        %v1612 = vpack.c.b16 %v1584, %v1582
        %v1613 = vpack.c.b16 %v1585, %v1583
        %v1614 = vpack.c.b16 %v1588, %v1586
        %v1615 = vpack.c.b16 %v1589, %v1587
        %v1616 = vpack.c.b16 %v1592, %v1590
        %v1617 = vpack.c.b16 %v1593, %v1591
        %v1618 = vpack.c.b16 %v1596, %v1594
        %v1619 = vpack.c.b16 %v1597, %v1595
        %v1620 = vpack.c.b16 %v1600, %v1598
        %v1621 = vpack.c.b16 %v1601, %v1599
        %v1622 = vpack.c.b16 %v1604, %v1602
        %v1623 = vpack.c.b16 %v1605, %v1603
        %v1624 = vpack.c.b16 %v1608, %v1606
        %v1625 = vpack.c.b16 %v1609, %v1607
        %1642 = vmatprep.subr.bf16.mxu0 %v1611
        %1643 = vmatpush1.bf16.msra.mxu0 %v1610
        %1644 = vmatprep.subr.bf16.mxu0 %v1613
        %1645 = vmatpush1.bf16.msra.mxu0 %v1612
        %1646 = vmatprep.subr.bf16.mxu0 %v1615
        %1647 = vmatpush1.bf16.msra.mxu0 %v1614
        %1648 = vmatprep.subr.bf16.mxu0 %v1617
        %1649 = vmatpush1.bf16.msra.mxu0 %v1616
        %1650 = vmatprep.subr.bf16.mxu0 %v1619
        %1651 = vmatpush1.bf16.msra.mxu0 %v1618
        %1652 = vmatprep.subr.bf16.mxu0 %v1621
        %1653 = vmatpush1.bf16.msra.mxu0 %v1620
        %1654 = vmatprep.subr.bf16.mxu0 %v1623
        %1655 = vmatpush1.bf16.msra.mxu0 %v1622
        %1656 = vmatprep.subr.bf16.mxu0 %v1625
        %1657 = vmatpush1.bf16.msra.mxu0 %v1624
        %1658 = vmatprep.subr.bf16.mxu0 0
        %1659 = vmatpush1.bf16.msra.mxu0 0
        %1660 = vmatprep.subr.bf16.mxu0 0
        %1661 = vmatpush1.bf16.msra.mxu0 0
        %1662 = vmatprep.subr.bf16.mxu0 0
        %1663 = vmatpush1.bf16.msra.mxu0 0
        %1664 = vmatprep.subr.bf16.mxu0 0
        %1665 = vmatpush1.bf16.msra.mxu0 0
        %1666 = vmatprep.subr.bf16.mxu0 0
        %1667 = vmatpush1.bf16.msra.mxu0 0
        %1668 = vmatprep.subr.bf16.mxu0 0
        %1669 = vmatpush1.bf16.msra.mxu0 0
        %1670 = vmatprep.subr.bf16.mxu0 0
        %1671 = vmatpush1.bf16.msra.mxu0 0
        %1672 = vmatprep.subr.bf16.mxu0 0
        %1673 = vmatpush1.bf16.msra.mxu0 0
        %1674 = vmatprep.mubr.bf16.mxu0 0
        %1675 = vmatmul.mubr.bf16.gmra.mrb[0].mxu0 %v1533
        %v1676 = vpop.f32.mrb[0].mxu0
        %v1677 = vadd.f32 %v1555, %v1676
        %v1678 = vpop.f32.mrb[0].mxu0
        %v1679 = vadd.f32 %v1559, %v1678
        %v1680 = vpop.f32.mrb[0].mxu0
        %v1681 = vpop.f32.mrb[0].mxu0
        %1682 = vdwg.mxu0
        %v1683 = vmax.f32 %v1677, 0.0
        %v1684 = vmax.f32 %v1679, 0.0
        %v1685 = vpack.c.bf16 %v1683, %v1683
        %v1686 = vpack.c.bf16 %v1684, %v1684
        %v1687 = vld [vmem:[%s461] sm:$0xf]
        %v1688 = vld [vmem:[%s461 + $0x4] sm:$0xf]
        %v1689 = vld [vmem:[%s461 + $0x8] sm:$0xf]
        %v1690 = vld [vmem:[%s461 + $0xc] sm:$0xf]
        %v1691 = vld [vmem:[%s461 + $0x10] sm:$0xf]
        %v1692 = vld [vmem:[%s461 + $0x14] sm:$0xf]
        %v1693 = vld [vmem:[%s461 + $0x18] sm:$0xf]
        %v1694 = vld [vmem:[%s461 + $0x1c] sm:$0xf]
        %v1695 = vld [vmem:[%s461 + $0x20] sm:$0xf]
        %v1696 = vld [vmem:[%s461 + $0x24] sm:$0xf]
        %v1697 = vld [vmem:[%s461 + $0x28] sm:$0xf]
        %v1698 = vld [vmem:[%s461 + $0x2c] sm:$0xf]
        %v1699 = vld [vmem:[%s461 + $0x30] sm:$0xf]
        %v1700 = vld [vmem:[%s461 + $0x34] sm:$0xf]
        %v1701 = vld [vmem:[%s461 + $0x38] sm:$0xf]
        %v1702 = vld [vmem:[%s461 + $0x3c] sm:$0xf]
        %v1703 = vld [vmem:[%s461 + $0x40] sm:$0xf]
        %v1704 = vld [vmem:[%s461 + $0x44] sm:$0xf]
        %v1705 = vld [vmem:[%s461 + $0x48] sm:$0xf]
        %v1706 = vld [vmem:[%s461 + $0x4c] sm:$0xf]
        %v1707 = vld [vmem:[%s461 + $0x50] sm:$0xf]
        %v1708 = vld [vmem:[%s461 + $0x54] sm:$0xf]
        %v1709 = vld [vmem:[%s461 + $0x58] sm:$0xf]
        %v1710 = vld [vmem:[%s461 + $0x5c] sm:$0xf]
        %v1711 = vld [vmem:[%s461 + $0x60] sm:$0xf]
        %v1712 = vld [vmem:[%s461 + $0x64] sm:$0xf]
        %v1713 = vld [vmem:[%s461 + $0x68] sm:$0xf]
        %v1714 = vld [vmem:[%s461 + $0x6c] sm:$0xf]
        %v1715 = vld [vmem:[%s461 + $0x70] sm:$0xf]
        %v1716 = vld [vmem:[%s461 + $0x74] sm:$0xf]
        %v1717 = vld [vmem:[%s461 + $0x78] sm:$0xf]
        %v1718 = vld [vmem:[%s461 + $0x7c] sm:$0xf]
        %v1719 = vlaneseq
        %v1720 = vshrl.u32 %v1719, 7
        %v1721 = vsub.s32 0, %v1720
        %v1722 = vrot.slane %v549, %v1721
        %v1755 = vunpack.c.l.b16 %v1687
        %v1756 = vunpack.c.l.b16 %v1688
        %v1757 = vunpack.c.l.b16 %v1689
        %v1758 = vunpack.c.l.b16 %v1690
        %v1759 = vunpack.c.l.b16 %v1691
        %v1760 = vunpack.c.l.b16 %v1692
        %v1761 = vunpack.c.l.b16 %v1693
        %v1762 = vunpack.c.l.b16 %v1694
        %v1763 = vunpack.c.l.b16 %v1695
        %v1764 = vunpack.c.l.b16 %v1696
        %v1765 = vunpack.c.l.b16 %v1697
        %v1766 = vunpack.c.l.b16 %v1698
        %v1767 = vunpack.c.l.b16 %v1699
        %v1768 = vunpack.c.l.b16 %v1700
        %v1769 = vunpack.c.l.b16 %v1701
        %v1770 = vunpack.c.l.b16 %v1702
        %v1771 = vunpack.c.l.b16 %v1703
        %v1772 = vunpack.c.l.b16 %v1704
        %v1773 = vunpack.c.l.b16 %v1705
        %v1774 = vunpack.c.l.b16 %v1706
        %v1775 = vunpack.c.l.b16 %v1707
        %v1776 = vunpack.c.l.b16 %v1708
        %v1777 = vunpack.c.l.b16 %v1709
        %v1778 = vunpack.c.l.b16 %v1710
        %v1779 = vunpack.c.l.b16 %v1711
        %v1780 = vunpack.c.l.b16 %v1712
        %v1781 = vunpack.c.l.b16 %v1713
        %v1782 = vunpack.c.l.b16 %v1714
        %v1783 = vunpack.c.l.b16 %v1715
        %v1784 = vunpack.c.l.b16 %v1716
        %v1785 = vunpack.c.l.b16 %v1717
        %v1786 = vunpack.c.l.b16 %v1718
        %v1787 = vpack.c.b16 %v1756, %v1755
        %v1788 = vpack.c.b16 %v1758, %v1757
        %v1789 = vpack.c.b16 %v1760, %v1759
        %v1790 = vpack.c.b16 %v1762, %v1761
        %v1791 = vpack.c.b16 %v1764, %v1763
        %v1792 = vpack.c.b16 %v1766, %v1765
        %v1793 = vpack.c.b16 %v1768, %v1767
        %v1794 = vpack.c.b16 %v1770, %v1769
        %v1795 = vpack.c.b16 %v1772, %v1771
        %v1796 = vpack.c.b16 %v1774, %v1773
        %v1797 = vpack.c.b16 %v1776, %v1775
        %v1798 = vpack.c.b16 %v1778, %v1777
        %v1799 = vpack.c.b16 %v1780, %v1779
        %v1800 = vpack.c.b16 %v1782, %v1781
        %v1801 = vpack.c.b16 %v1784, %v1783
        %v1802 = vpack.c.b16 %v1786, %v1785
        %1819 = vmatprep.subr.bf16.mxu0 0
        %1820 = vmatpush1.bf16.msra.mxu0 %v1787
        %1821 = vmatprep.subr.bf16.mxu0 0
        %1822 = vmatpush1.bf16.msra.mxu0 %v1788
        %1823 = vmatprep.subr.bf16.mxu0 0
        %1824 = vmatpush1.bf16.msra.mxu0 %v1789
        %1825 = vmatprep.subr.bf16.mxu0 0
        %1826 = vmatpush1.bf16.msra.mxu0 %v1790
        %1827 = vmatprep.subr.bf16.mxu0 0
        %1828 = vmatpush1.bf16.msra.mxu0 %v1791
        %1829 = vmatprep.subr.bf16.mxu0 0
        %1830 = vmatpush1.bf16.msra.mxu0 %v1792
        %1831 = vmatprep.subr.bf16.mxu0 0
        %1832 = vmatpush1.bf16.msra.mxu0 %v1793
        %1833 = vmatprep.subr.bf16.mxu0 0
        %1834 = vmatpush1.bf16.msra.mxu0 %v1794
        %1835 = vmatprep.subr.bf16.mxu0 0
        %1836 = vmatpush1.bf16.msra.mxu0 %v1795
        %1837 = vmatprep.subr.bf16.mxu0 0
        %1838 = vmatpush1.bf16.msra.mxu0 %v1796
        %1839 = vmatprep.subr.bf16.mxu0 0
        %1840 = vmatpush1.bf16.msra.mxu0 %v1797
        %1841 = vmatprep.subr.bf16.mxu0 0
        %1842 = vmatpush1.bf16.msra.mxu0 %v1798
        %1843 = vmatprep.subr.bf16.mxu0 0
        %1844 = vmatpush1.bf16.msra.mxu0 %v1799
        %1845 = vmatprep.subr.bf16.mxu0 0
        %1846 = vmatpush1.bf16.msra.mxu0 %v1800
        %1847 = vmatprep.subr.bf16.mxu0 0
        %1848 = vmatpush1.bf16.msra.mxu0 %v1801
        %1849 = vmatprep.subr.bf16.mxu0 0
        %1850 = vmatpush1.bf16.msra.mxu0 %v1802
        %1851 = vmatprep.mubr.bf16.mxu0 %v1686
        %1852 = vmatmul.mubr.bf16.gmra.mrb[0].mxu0 %v1685
        %v1853 = vpop.f32.mrb[0].mxu0
        %v1854 = vadd.f32 %v1722, %v1853
        %v1855 = vpop.f32.mrb[0].mxu0
        %v1856 = vpop.f32.mrb[0].mxu0
        %v1857 = vpop.f32.mrb[0].mxu0
        %1858 = vdwg.mxu0
        %v1859 = vadd.f32 %v1532, %v1854
        %1860 = vadd.xlane.f32.xlu0 %v1859
        %v1861 = vpop.xlane.xlu0 %1860
        %v1862 = vmul.f32 %v1861, %v1513
        %v1863 = vsub.f32 %v1859, %v1862
        %v1864 = vmul.f32 %v1863, %v1863
        %1865 = vadd.xlane.f32.xlu0 %v1864
        %v1866 = vpop.xlane.xlu0 %1865
        %v1867 = vmul.f32 %v1866, %v1513
        %v1868 = vadd.f32 %v1867, 1e-05
        %v1869 = vrsqrt.pop %v1868
        %v1870 = vmul.f32 %v1863, %v1869
        %v1871 = vlaneseq
        %v1872 = vshrl.u32 %v1871, 7
        %v1873 = vsub.s32 0, %v1872
        %v1874 = vrot.slane %v550, %v1873
        %v1875 = vmul.f32 %v1870, %v1874
        %v1876 = vlaneseq
        %v1877 = vshrl.u32 %v1876, 7
        %v1878 = vsub.s32 0, %v1877
        %v1879 = vrot.slane %v551, %v1878
        %v1880 = vadd.f32 %v1875, %v1879
        %1881 = vst [vmem:[#allocation2] sm:$0xff] %v1880
        %p1882 = scmp.eq.s32.totalorder %s36, 1
        // Predicated region
        $region77: #{tpu_custom_call.1} parent=51 // pred_check
          %p1883 = pneg %p1882
        $region78: #{tpu_custom_call.1} parent=51 // pred_check_branch
          %1885 = sbr.rel (%p1883) target = $region80
        $region79: #{tpu_custom_call.1} parent=51 // pred_region
          %1886 = vst [vmem:[%s525] sm:$0xff] %v1880
        $region80: #{tpu_custom_call.1} parent=51 // pred_fallthru
          _
        %s1887 = sand.u32 %s259, 1
        %s1888 = scalar_lea.sflag [#allocation5], %s1887
        %s1889 = sand.u32 %s259, 1
        %s1890 = smul.addr %s1889, 8
        %s1891 = scalar_lea.vmem [#allocation12], %s1890
        // Predicated region
        $region81: #{tpu_custom_call.1} parent=51 // pred_check
          %p1892 = pneg %p269
        $region82: #{tpu_custom_call.1} parent=51 // pred_check_branch
          %1894 = sbr.rel (%p1892) target = $region84
        $region83: #{tpu_custom_call.1} parent=51 // pred_region
          %s1896 = ssub.s32 128, 128
          %1897 = vsyncadd %s1888, %s1896
          %s1898 = smul.addr %s35, 128
          %s1899 = scalar_lea.hbm %s8, %s1898
          %s1901 = sshll.u32 %s1891, 4
          %s1902 = int_to_ptr.vmem [resolvable:$true] %s1901
          %1904 = dma.vmem_to_hbm [thread:$0]  %s1902, 128, %s1899, %s1888
        $region84: #{tpu_custom_call.1} parent=51 // pred_fallthru
          _
      $region52: #{tpu_custom_call.1} parent=5 // pred_fallthru
        _
      %p1905 = scmp.le.s32.totalorder 2, %s26
      // Predicated region
      $region85: #{tpu_custom_call.1} parent=5 // pred_check
        %p1906 = pneg %p1905
      $region86: #{tpu_custom_call.1} parent=5 // pred_check_branch
        %1908 = sbr.rel (%p1906) target = $region88
      $region87: #{tpu_custom_call.1} parent=5 // pred_region
        %s1909 = ssub.s32 %s26, 2
        // Predicated region
        $region89: #{tpu_custom_call.1} parent=87 // pred_check
          %p1910 = pneg %p275
        $region90: #{tpu_custom_call.1} parent=87 // pred_check_branch
          %1912 = sbr.rel (%p1910) target = $region92
        $region91: #{tpu_custom_call.1} parent=87 // pred_region
          %s1913 = sand.u32 %s260, 1
          %s1914 = scalar_lea.sflag [#allocation5], %s1913
          %s1915 = sand.u32 %s260, 1
          %s1916 = smul.addr %s1915, 8
          %s1917 = scalar_lea.vmem [#allocation12], %s1916
          %1918 = dma.done %s1914, 128
        $region92: #{tpu_custom_call.1} parent=87 // pred_fallthru
          _
      $region88: #{tpu_custom_call.1} parent=5 // pred_fallthru
        _
    $region6: #{tpu_custom_call.1} parent=1 // loop_footer
      %s30 = sadd.s32 1, %s26
    $region7: #{tpu_custom_call.1} parent=1 // loop_footer_branch
      %25 = sbr.rel target = $region3
    $region8: #{tpu_custom_call.1} parent=1 // loop_exit
      _
    %1919 = vsyncpa [#allocation4], 1
    %s1920 = scalar_lea.sflag [#allocation4], 1
    %1921 = vsyncpa %s1920, 1
    %1922 = vsyncpa [#allocation7], 1
    %s1923 = scalar_lea.sflag [#allocation7], 1
    %1924 = vsyncpa %s1923, 1
    %1925 = vsyncpa [#allocation10], 1
    %s1926 = scalar_lea.sflag [#allocation10], 1
    %1927 = vsyncpa %s1926, 1
    %1928 = vsyncpa [#allocation5], 1
    %s1929 = scalar_lea.sflag [#allocation5], 1
    %1930 = vsyncpa %s1929, 1

</llo_original>
